<compile_context>
chip_gen: v5e
topology: v5e:2x2
jax: 0.10.0
libtpu: 0.0.40
codegen_flags: <defaults>
</compile_context>

<pallas_src>
import math

import jax
import jax.numpy as jnp
from jax.experimental import pallas as pl
from jax.experimental.pallas import tpu as pltpu

# ----------------------------- config (small) --------------------------------
SEQ = 8
HIDDEN = 32
NUM_HEADS = 4
HEAD_DIM = HIDDEN // NUM_HEADS
FFN = 64
NUM_LAYERS = 2
VOCAB = 100
VOCAB_PAD = 128          # lane-aligned in-kernel one-hot gather
NUM_LABELS = 20
NUM_LABELS_PAD = 128     # lane-dense output store; sliced back to 20 in wrapper
EPS = 1e-5

# ---- parameter slab layout (rows of a [SLAB_ROWS_PAD, 128] f32 array) -------
ROW_POS = 0                       # rows [0, SEQ)       lanes [:HIDDEN]  pos_emb
ROW_BIAS = SEQ                    # 8                   lanes [:SEQ]     mask bias
ROW_EMB_G = SEQ + 1               # 9                   lanes [:HIDDEN]
ROW_EMB_B = SEQ + 2               # 10                  lanes [:HIDDEN]
ROW_BCLS = SEQ + 3                # 11                  lanes [:128]
ROW_LAYER = SEQ + 4               # 12, then 8 rows per encoder layer
(LR_BQKV, LR_BO, LR_B1, LR_B2,
 LR_LN1G, LR_LN1B, LR_LN2G, LR_LN2B) = range(8)
ROWS_PER_LAYER = 8
SLAB_ROWS = ROW_LAYER + ROWS_PER_LAYER * NUM_LAYERS   # 28
SLAB_ROWS_PAD = 32
SLAB_LANES = 128

VMEM_SPEC = pl.BlockSpec(memory_space=pltpu.MemorySpace.VMEM)


# ------------------------------- fused kernel --------------------------------
def membert_fused_kernel(ids_ref, wemb_ref, slab_ref, wcls_ref,
                         wqkv_ref, wo_ref, w1_ref, w2_ref, out_ref):
    """Whole forward in one kernel; all activations stay resident in VMEM."""

    def layer_norm(x, g, b):
        mu = jnp.mean(x, axis=-1, keepdims=True)
        xc = x - mu
        var = jnp.mean(xc * xc, axis=-1, keepdims=True)
        return xc * jax.lax.rsqrt(var + EPS) * g + b

    slab = slab_ref[...]                                        # [32, 128]

    def srow(r, width):                                          # [1, width]
        return slab[r:r + 1, :width]

    # ---- embedding gather as a one-hot @ table MXU matmul (no XLA gather) ---
    # ids >= VOCAB silently map to a zero embedding (checked upstream).
    ids = ids_ref[...]                                           # [S, 1] int32
    iota = jax.lax.broadcasted_iota(jnp.int32, (SEQ, VOCAB_PAD), 1)
    onehot = (iota == ids).astype(jnp.float32)                   # [S, VOCAB_PAD]
    word = jnp.dot(onehot, wemb_ref[...], preferred_element_type=jnp.float32)
    pos = slab[ROW_POS:ROW_POS + SEQ, :HIDDEN]                   # [S, H]
    x = layer_norm(word + pos, srow(ROW_EMB_G, HIDDEN), srow(ROW_EMB_B, HIDDEN))

    bias = srow(ROW_BIAS, SEQ)                                   # [1, S] additive mask
    scale = 1.0 / math.sqrt(HEAD_DIM)

    for l in range(NUM_LAYERS):
        base = ROW_LAYER + l * ROWS_PER_LAYER

        # ---- multi-head self-attention: one lane-dense fused-QKV matmul -----
        qkv = (jnp.dot(x, wqkv_ref[l], preferred_element_type=jnp.float32)
               + srow(base + LR_BQKV, 3 * HIDDEN))               # [S, 96]

        attn = jnp.zeros((SEQ, HIDDEN), jnp.float32)
        for h in range(NUM_HEADS):
            lo = h * HEAD_DIM
            q_h = qkv[:, lo:lo + HEAD_DIM]                       # [S, HD]
            k_h = qkv[:, HIDDEN + lo:HIDDEN + lo + HEAD_DIM]
            v_h = qkv[:, 2 * HIDDEN + lo:2 * HIDDEN + lo + HEAD_DIM]

            s = jnp.einsum('qd,kd->qk', q_h, k_h,
                           preferred_element_type=jnp.float32) * scale + bias
            s = s - jnp.max(s, axis=-1, keepdims=True)
            p = jnp.exp(s)
            denom = jnp.sum(p, axis=-1, keepdims=True)           # >= 1 (max-sub)
            p = p * pl.reciprocal(denom, approx=True)            # EUP, off VALU
            ctx = jnp.dot(p, v_h, preferred_element_type=jnp.float32)   # [S, HD]
            # head-sum fused into the output projection accumulate
            attn = attn + jnp.dot(ctx, wo_ref[l * NUM_HEADS + h],
                                  preferred_element_type=jnp.float32)   # [S, H]
        attn = attn + srow(base + LR_BO, HIDDEN)
        x = layer_norm(x + attn, srow(base + LR_LN1G, HIDDEN),
                       srow(base + LR_LN1B, HIDDEN))             # post-LN

        # ---- feed-forward ----------------------------------------------------
        hid = (jnp.dot(x, w1_ref[l], preferred_element_type=jnp.float32)
               + srow(base + LR_B1, FFN))
        hid = jax.nn.gelu(hid)
        f = (jnp.dot(hid, w2_ref[l], preferred_element_type=jnp.float32)
             + srow(base + LR_B2, HIDDEN))
        x = layer_norm(x + f, srow(base + LR_LN2G, HIDDEN),
                       srow(base + LR_LN2B, HIDDEN))

    # ---- token-classification head + sigmoid, lane-dense padded output ------
    logits = (jnp.dot(x, wcls_ref[...], preferred_element_type=jnp.float32)
              + srow(ROW_BCLS, NUM_LABELS_PAD))                  # [S, 128]
    out_ref[...] = jax.nn.sigmoid(logits)                        # == nn.Sigmoid()


# ------------------------------ wrapper ---------------------------------------
# TODO(synk): the HuggingFace RobertaTokenizer has no Pallas equivalent; the
# forward consumes already-tokenized input_ids (the [:, 1:-1] special-token
# slice is assumed applied upstream).
def membert_forward(input_ids, attention_mask, params):
    # fold the weight-independent mask bias into the parameter slab
    bias_row = (1.0 - attention_mask.reshape(-1).astype(jnp.float32)) * (-1e9)
    slab = params["slab"].at[ROW_BIAS, :SEQ].set(bias_row)

    inputs = [
        input_ids.reshape(SEQ, 1).astype(jnp.int32),
        params["word_emb"],            # [128, 32]
        slab,                          # [32, 128]
        params["w_cls"],               # [32, 128]
        params["wqkv"],                # [L, 32, 96]
        params["wo"],                  # [L*NH, 8, 32]
        params["w1"],                  # [L, 32, 64]
        params["w2"],                  # [L, 64, 32]
    ]

    out_padded = pl.pallas_call(
        membert_fused_kernel,
        in_specs=[VMEM_SPEC] * len(inputs),
        out_specs=VMEM_SPEC,
        out_shape=jax.ShapeDtypeStruct((SEQ, NUM_LABELS_PAD), jnp.float32),
    )(*inputs)
    # output [S, 20] == out.squeeze(0) of the PyTorch module
    return out_padded[:, :NUM_LABELS]


# --------------------------- parameter init -----------------------------------
def init_params(key):
    def nrm(k, shape, scale=0.02):
        return scale * jax.random.normal(k, shape, dtype=jnp.float32)

    keys = jax.random.split(key, 4 + NUM_LAYERS)
    word_emb = jnp.pad(nrm(keys[0], (VOCAB, HIDDEN)),
                       ((0, VOCAB_PAD - VOCAB), (0, 0)))
    pos_emb = nrm(keys[1], (SEQ, HIDDEN))
    w_cls = jnp.pad(nrm(keys[2], (HIDDEN, NUM_LABELS)),
                    ((0, 0), (0, NUM_LABELS_PAD - NUM_LABELS)))

    # one packed slab for every 1-row parameter (biases / LN / pos_emb / b_cls)
    slab = jnp.zeros((SLAB_ROWS_PAD, SLAB_LANES), jnp.float32)
    slab = slab.at[ROW_POS:ROW_POS + SEQ, :HIDDEN].set(pos_emb)
    slab = slab.at[ROW_EMB_G, :HIDDEN].set(1.0)
    # ROW_EMB_B / ROW_BCLS / per-layer betas & biases stay zero; ROW_BIAS set per call

    wqkv_l, wo_l, w1_l, w2_l = [], [], [], []
    for l in range(NUM_LAYERS):
        lk = jax.random.split(keys[4 + l], 6)
        wq = nrm(lk[0], (HIDDEN, HIDDEN))
        wk = nrm(lk[1], (HIDDEN, HIDDEN))
        wv = nrm(lk[2], (HIDDEN, HIDDEN))
        wqkv_l.append(jnp.concatenate([wq, wk, wv], axis=1))         # [H, 3H]
        wo_l.append(nrm(lk[3], (HIDDEN, HIDDEN))
                    .reshape(NUM_HEADS, HEAD_DIM, HIDDEN))           # [NH, HD, H]
        w1_l.append(nrm(lk[4], (HIDDEN, FFN)))
        w2_l.append(nrm(lk[5], (FFN, HIDDEN)))

        base = ROW_LAYER + l * ROWS_PER_LAYER
        slab = slab.at[base + LR_LN1G, :HIDDEN].set(1.0)
        slab = slab.at[base + LR_LN2G, :HIDDEN].set(1.0)

    return {
        "word_emb": word_emb,
        "w_cls": w_cls,
        "slab": slab,
        "wqkv": jnp.stack(wqkv_l, 0),                                # [L, H, 3H]
        "wo": jnp.stack(wo_l, 0).reshape(NUM_LAYERS * NUM_HEADS,
                                         HEAD_DIM, HIDDEN),          # [L*NH, HD, H]
        "w1": jnp.stack(w1_l, 0),                                    # [L, H, FFN]
        "w2": jnp.stack(w2_l, 0),                                    # [L, FFN, H]
    }


# -------------------------------- main -----------------------------------------
if __name__ == "__main__":
    key = jax.random.PRNGKey(0)
    k_param, k_ids = jax.random.split(key)

    params = init_params(k_param)
    input_ids = jax.random.randint(k_ids, (SEQ,), 0, VOCAB, dtype=jnp.int32)
    attention_mask = jnp.ones((1, SEQ), dtype=jnp.float32)   # tokenizer gives ones

    # upstream guard: ids outside [0, VOCAB) would silently map to a zero embedding
    assert int(jnp.max(input_ids)) < VOCAB and int(jnp.min(input_ids)) >= 0

    out = membert_forward(input_ids, attention_mask, params)
    out = jax.block_until_ready(out)

    assert out.shape == (SEQ, NUM_LABELS)
    assert bool(jnp.all((out >= 0.0) & (out <= 1.0)))        # sigmoid range
    print("KERNEL_OK")
</pallas_src>

<mosaic_0001>
module attributes {stable_mosaic.version = 11 : i64} {
  func.func @membert_fused_kernel(%arg0: memref<8x1xi32, #tpu.memory_space<vmem>>, %arg1: memref<128x32xf32, #tpu.memory_space<vmem>>, %arg2: memref<32x128xf32, #tpu.memory_space<vmem>>, %arg3: memref<32x128xf32, #tpu.memory_space<vmem>>, %arg4: memref<2x32x96xf32, #tpu.memory_space<vmem>>, %arg5: memref<8x8x32xf32, #tpu.memory_space<vmem>>, %arg6: memref<2x32x64xf32, #tpu.memory_space<vmem>>, %arg7: memref<2x64x32xf32, #tpu.memory_space<vmem>>, %arg8: memref<8x128xf32, #tpu.memory_space<vmem>>) attributes {dimension_semantics = [], scalar_prefetch = 0 : i64, scratch_operands = 0 : i64, tpu.core_type = #tpu.core_type<tc>} {
    %c0 = arith.constant 0 : index
    %c0_0 = arith.constant 0 : index
    %0 = vector.load %arg2[%c0, %c0_0] : memref<32x128xf32, #tpu.memory_space<vmem>>, vector<32x128xf32>
    %c0_1 = arith.constant 0 : index
    %c0_2 = arith.constant 0 : index
    %1 = vector.load %arg0[%c0_1, %c0_2] : memref<8x1xi32, #tpu.memory_space<vmem>>, vector<8x1xi32>
    %2 = tpu.iota {dimensions = array<i32: 1>} : vector<8x128xi32>
    %3 = vector.broadcast %1 : vector<8x1xi32> to vector<8x128xi32>
    %4 = arith.cmpi eq, %2, %3 : vector<8x128xi32>
    %5 = arith.extui %4 : vector<8x128xi1> to vector<8x128xi32>
    %6 = arith.sitofp %5 : vector<8x128xi32> to vector<8x128xf32>
    %c0_3 = arith.constant 0 : index
    %c0_4 = arith.constant 0 : index
    %7 = vector.load %arg1[%c0_3, %c0_4] : memref<128x32xf32, #tpu.memory_space<vmem>>, vector<128x32xf32>
    %cst = arith.constant dense<0.000000e+00> : vector<8x32xf32>
    %8 = tpu.matmul %6, %7, %cst {dimension_numbers = #tpu.dot_dimension_numbers<[1], [0], [0], [1], [0, 0, 1, 1], [], []>} : vector<8x128xf32>, vector<128x32xf32>, vector<8x32xf32> -> vector<8x32xf32>
    %9 = vector.extract_strided_slice %0 {offsets = [0, 0], sizes = [8, 32], strides = [1, 1]} : vector<32x128xf32> to vector<8x32xf32>
    %10 = arith.addf %8, %9 : vector<8x32xf32>
    %11 = vector.extract_strided_slice %0 {offsets = [9, 0], sizes = [1, 32], strides = [1, 1]} : vector<32x128xf32> to vector<1x32xf32>
    %12 = vector.extract_strided_slice %0 {offsets = [10, 0], sizes = [1, 32], strides = [1, 1]} : vector<32x128xf32> to vector<1x32xf32>
    %cst_5 = arith.constant dense<0.000000e+00> : vector<8xf32>
    %13 = vector.multi_reduction <add>, %10, %cst_5 [1] : vector<8x32xf32> to vector<8xf32>
    %14 = vector.shape_cast %13 : vector<8xf32> to vector<8x1xf32>
    %cst_6 = arith.constant 3.200000e+01 : f32
    %15 = vector.broadcast %cst_6 : f32 to vector<8x1xf32>
    %16 = arith.divf %14, %15 : vector<8x1xf32>
    %17 = vector.broadcast %16 : vector<8x1xf32> to vector<8x32xf32>
    %18 = arith.subf %10, %17 : vector<8x32xf32>
    %19 = arith.mulf %18, %18 : vector<8x32xf32>
    %cst_7 = arith.constant dense<0.000000e+00> : vector<8xf32>
    %20 = vector.multi_reduction <add>, %19, %cst_7 [1] : vector<8x32xf32> to vector<8xf32>
    %21 = vector.shape_cast %20 : vector<8xf32> to vector<8x1xf32>
    %cst_8 = arith.constant 3.200000e+01 : f32
    %22 = vector.broadcast %cst_8 : f32 to vector<8x1xf32>
    %23 = arith.divf %21, %22 : vector<8x1xf32>
    %cst_9 = arith.constant 9.99999974E-6 : f32
    %24 = vector.broadcast %cst_9 : f32 to vector<8x1xf32>
    %25 = arith.addf %23, %24 : vector<8x1xf32>
    %26 = math.rsqrt %25 : vector<8x1xf32>
    %27 = vector.broadcast %26 : vector<8x1xf32> to vector<8x32xf32>
    %28 = arith.mulf %18, %27 : vector<8x32xf32>
    %29 = vector.broadcast %11 : vector<1x32xf32> to vector<8x32xf32>
    %30 = arith.mulf %28, %29 : vector<8x32xf32>
    %31 = vector.broadcast %12 : vector<1x32xf32> to vector<8x32xf32>
    %32 = arith.addf %30, %31 : vector<8x32xf32>
    %33 = vector.extract_strided_slice %0 {offsets = [8, 0], sizes = [1, 8], strides = [1, 1]} : vector<32x128xf32> to vector<1x8xf32>
    %c0_10 = arith.constant 0 : index
    %c0_11 = arith.constant 0 : index
    %c0_12 = arith.constant 0 : index
    %34 = vector.load %arg4[%c0_10, %c0_11, %c0_12] : memref<2x32x96xf32, #tpu.memory_space<vmem>>, vector<1x32x96xf32>
    %35 = vector.shape_cast %34 : vector<1x32x96xf32> to vector<32x96xf32>
    %cst_13 = arith.constant dense<0.000000e+00> : vector<8x96xf32>
    %36 = tpu.matmul %32, %35, %cst_13 {dimension_numbers = #tpu.dot_dimension_numbers<[1], [0], [0], [1], [0, 0, 1, 1], [], []>} : vector<8x32xf32>, vector<32x96xf32>, vector<8x96xf32> -> vector<8x96xf32>
    %37 = vector.extract_strided_slice %0 {offsets = [12, 0], sizes = [1, 96], strides = [1, 1]} : vector<32x128xf32> to vector<1x96xf32>
    %38 = vector.broadcast %37 : vector<1x96xf32> to vector<8x96xf32>
    %39 = arith.addf %36, %38 : vector<8x96xf32>
    %cst_14 = arith.constant 0.000000e+00 : f32
    %40 = vector.broadcast %cst_14 : f32 to vector<8x32xf32>
    %41 = vector.extract_strided_slice %39 {offsets = [0, 0], sizes = [8, 8], strides = [1, 1]} : vector<8x96xf32> to vector<8x8xf32>
    %42 = vector.extract_strided_slice %39 {offsets = [0, 32], sizes = [8, 8], strides = [1, 1]} : vector<8x96xf32> to vector<8x8xf32>
    %43 = vector.extract_strided_slice %39 {offsets = [0, 64], sizes = [8, 8], strides = [1, 1]} : vector<8x96xf32> to vector<8x8xf32>
    "tpu.trace_start"() <{level = 10 : i32, message = "qd,kd->qk"}> : () -> ()
    %cst_15 = arith.constant dense<0.000000e+00> : vector<8x8xf32>
    %44 = tpu.matmul %41, %42, %cst_15 {dimension_numbers = #tpu.dot_dimension_numbers<[1], [1], [0], [0], [0, 0, 1, 0], [], []>} : vector<8x8xf32>, vector<8x8xf32>, vector<8x8xf32> -> vector<8x8xf32>
    "tpu.trace_stop"() : () -> ()
    %cst_16 = arith.constant 0.353553385 : f32
    %45 = vector.broadcast %cst_16 : f32 to vector<8x8xf32>
    %46 = arith.mulf %44, %45 : vector<8x8xf32>
    %47 = vector.broadcast %33 : vector<1x8xf32> to vector<8x8xf32>
    %48 = arith.addf %46, %47 : vector<8x8xf32>
    %cst_17 = arith.constant dense<0xFF800000> : vector<8xf32>
    %49 = vector.multi_reduction <maximumf>, %48, %cst_17 [1] : vector<8x8xf32> to vector<8xf32>
    %50 = vector.shape_cast %49 : vector<8xf32> to vector<8x1xf32>
    %51 = vector.broadcast %50 : vector<8x1xf32> to vector<8x8xf32>
    %52 = arith.subf %48, %51 : vector<8x8xf32>
    %53 = math.exp %52 : vector<8x8xf32>
    %cst_18 = arith.constant dense<0.000000e+00> : vector<8xf32>
    %54 = vector.multi_reduction <add>, %53, %cst_18 [1] : vector<8x8xf32> to vector<8xf32>
    %55 = vector.shape_cast %54 : vector<8xf32> to vector<8x1xf32>
    %56 = tpu.reciprocal %55 {approx = true} : vector<8x1xf32> -> vector<8x1xf32>
    %57 = vector.broadcast %56 : vector<8x1xf32> to vector<8x8xf32>
    %58 = arith.mulf %53, %57 : vector<8x8xf32>
    %cst_19 = arith.constant dense<0.000000e+00> : vector<8x8xf32>
    %59 = tpu.matmul %58, %43, %cst_19 {dimension_numbers = #tpu.dot_dimension_numbers<[1], [0], [0], [1], [0, 0, 1, 1], [], []>} : vector<8x8xf32>, vector<8x8xf32>, vector<8x8xf32> -> vector<8x8xf32>
    %c0_20 = arith.constant 0 : index
    %c0_21 = arith.constant 0 : index
    %c0_22 = arith.constant 0 : index
    %60 = vector.load %arg5[%c0_20, %c0_21, %c0_22] : memref<8x8x32xf32, #tpu.memory_space<vmem>>, vector<1x8x32xf32>
    %61 = vector.shape_cast %60 : vector<1x8x32xf32> to vector<8x32xf32>
    %cst_23 = arith.constant dense<0.000000e+00> : vector<8x32xf32>
    %62 = tpu.matmul %59, %61, %cst_23 {dimension_numbers = #tpu.dot_dimension_numbers<[1], [0], [0], [1], [0, 0, 1, 1], [], []>} : vector<8x8xf32>, vector<8x32xf32>, vector<8x32xf32> -> vector<8x32xf32>
    %63 = arith.addf %40, %62 : vector<8x32xf32>
    %64 = vector.extract_strided_slice %39 {offsets = [0, 8], sizes = [8, 8], strides = [1, 1]} : vector<8x96xf32> to vector<8x8xf32>
    %65 = vector.extract_strided_slice %39 {offsets = [0, 40], sizes = [8, 8], strides = [1, 1]} : vector<8x96xf32> to vector<8x8xf32>
    %66 = vector.extract_strided_slice %39 {offsets = [0, 72], sizes = [8, 8], strides = [1, 1]} : vector<8x96xf32> to vector<8x8xf32>
    "tpu.trace_start"() <{level = 10 : i32, message = "qd,kd->qk"}> : () -> ()
    %cst_24 = arith.constant dense<0.000000e+00> : vector<8x8xf32>
    %67 = tpu.matmul %64, %65, %cst_24 {dimension_numbers = #tpu.dot_dimension_numbers<[1], [1], [0], [0], [0, 0, 1, 0], [], []>} : vector<8x8xf32>, vector<8x8xf32>, vector<8x8xf32> -> vector<8x8xf32>
    "tpu.trace_stop"() : () -> ()
    %cst_25 = arith.constant 0.353553385 : f32
    %68 = vector.broadcast %cst_25 : f32 to vector<8x8xf32>
    %69 = arith.mulf %67, %68 : vector<8x8xf32>
    %70 = vector.broadcast %33 : vector<1x8xf32> to vector<8x8xf32>
    %71 = arith.addf %69, %70 : vector<8x8xf32>
    %cst_26 = arith.constant dense<0xFF800000> : vector<8xf32>
    %72 = vector.multi_reduction <maximumf>, %71, %cst_26 [1] : vector<8x8xf32> to vector<8xf32>
    %73 = vector.shape_cast %72 : vector<8xf32> to vector<8x1xf32>
    %74 = vector.broadcast %73 : vector<8x1xf32> to vector<8x8xf32>
    %75 = arith.subf %71, %74 : vector<8x8xf32>
    %76 = math.exp %75 : vector<8x8xf32>
    %cst_27 = arith.constant dense<0.000000e+00> : vector<8xf32>
    %77 = vector.multi_reduction <add>, %76, %cst_27 [1] : vector<8x8xf32> to vector<8xf32>
    %78 = vector.shape_cast %77 : vector<8xf32> to vector<8x1xf32>
    %79 = tpu.reciprocal %78 {approx = true} : vector<8x1xf32> -> vector<8x1xf32>
    %80 = vector.broadcast %79 : vector<8x1xf32> to vector<8x8xf32>
    %81 = arith.mulf %76, %80 : vector<8x8xf32>
    %cst_28 = arith.constant dense<0.000000e+00> : vector<8x8xf32>
    %82 = tpu.matmul %81, %66, %cst_28 {dimension_numbers = #tpu.dot_dimension_numbers<[1], [0], [0], [1], [0, 0, 1, 1], [], []>} : vector<8x8xf32>, vector<8x8xf32>, vector<8x8xf32> -> vector<8x8xf32>
    %c1 = arith.constant 1 : index
    %c0_29 = arith.constant 0 : index
    %c0_30 = arith.constant 0 : index
    %83 = vector.load %arg5[%c1, %c0_29, %c0_30] : memref<8x8x32xf32, #tpu.memory_space<vmem>>, vector<1x8x32xf32>
    %84 = vector.shape_cast %83 : vector<1x8x32xf32> to vector<8x32xf32>
    %cst_31 = arith.constant dense<0.000000e+00> : vector<8x32xf32>
    %85 = tpu.matmul %82, %84, %cst_31 {dimension_numbers = #tpu.dot_dimension_numbers<[1], [0], [0], [1], [0, 0, 1, 1], [], []>} : vector<8x8xf32>, vector<8x32xf32>, vector<8x32xf32> -> vector<8x32xf32>
    %86 = arith.addf %63, %85 : vector<8x32xf32>
    %87 = vector.extract_strided_slice %39 {offsets = [0, 16], sizes = [8, 8], strides = [1, 1]} : vector<8x96xf32> to vector<8x8xf32>
    %88 = vector.extract_strided_slice %39 {offsets = [0, 48], sizes = [8, 8], strides = [1, 1]} : vector<8x96xf32> to vector<8x8xf32>
    %89 = vector.extract_strided_slice %39 {offsets = [0, 80], sizes = [8, 8], strides = [1, 1]} : vector<8x96xf32> to vector<8x8xf32>
    "tpu.trace_start"() <{level = 10 : i32, message = "qd,kd->qk"}> : () -> ()
    %cst_32 = arith.constant dense<0.000000e+00> : vector<8x8xf32>
    %90 = tpu.matmul %87, %88, %cst_32 {dimension_numbers = #tpu.dot_dimension_numbers<[1], [1], [0], [0], [0, 0, 1, 0], [], []>} : vector<8x8xf32>, vector<8x8xf32>, vector<8x8xf32> -> vector<8x8xf32>
    "tpu.trace_stop"() : () -> ()
    %cst_33 = arith.constant 0.353553385 : f32
    %91 = vector.broadcast %cst_33 : f32 to vector<8x8xf32>
    %92 = arith.mulf %90, %91 : vector<8x8xf32>
    %93 = vector.broadcast %33 : vector<1x8xf32> to vector<8x8xf32>
    %94 = arith.addf %92, %93 : vector<8x8xf32>
    %cst_34 = arith.constant dense<0xFF800000> : vector<8xf32>
    %95 = vector.multi_reduction <maximumf>, %94, %cst_34 [1] : vector<8x8xf32> to vector<8xf32>
    %96 = vector.shape_cast %95 : vector<8xf32> to vector<8x1xf32>
    %97 = vector.broadcast %96 : vector<8x1xf32> to vector<8x8xf32>
    %98 = arith.subf %94, %97 : vector<8x8xf32>
    %99 = math.exp %98 : vector<8x8xf32>
    %cst_35 = arith.constant dense<0.000000e+00> : vector<8xf32>
    %100 = vector.multi_reduction <add>, %99, %cst_35 [1] : vector<8x8xf32> to vector<8xf32>
    %101 = vector.shape_cast %100 : vector<8xf32> to vector<8x1xf32>
    %102 = tpu.reciprocal %101 {approx = true} : vector<8x1xf32> -> vector<8x1xf32>
    %103 = vector.broadcast %102 : vector<8x1xf32> to vector<8x8xf32>
    %104 = arith.mulf %99, %103 : vector<8x8xf32>
    %cst_36 = arith.constant dense<0.000000e+00> : vector<8x8xf32>
    %105 = tpu.matmul %104, %89, %cst_36 {dimension_numbers = #tpu.dot_dimension_numbers<[1], [0], [0], [1], [0, 0, 1, 1], [], []>} : vector<8x8xf32>, vector<8x8xf32>, vector<8x8xf32> -> vector<8x8xf32>
    %c2 = arith.constant 2 : index
    %c0_37 = arith.constant 0 : index
    %c0_38 = arith.constant 0 : index
    %106 = vector.load %arg5[%c2, %c0_37, %c0_38] : memref<8x8x32xf32, #tpu.memory_space<vmem>>, vector<1x8x32xf32>
    %107 = vector.shape_cast %106 : vector<1x8x32xf32> to vector<8x32xf32>
    %cst_39 = arith.constant dense<0.000000e+00> : vector<8x32xf32>
    %108 = tpu.matmul %105, %107, %cst_39 {dimension_numbers = #tpu.dot_dimension_numbers<[1], [0], [0], [1], [0, 0, 1, 1], [], []>} : vector<8x8xf32>, vector<8x32xf32>, vector<8x32xf32> -> vector<8x32xf32>
    %109 = arith.addf %86, %108 : vector<8x32xf32>
    %110 = vector.extract_strided_slice %39 {offsets = [0, 24], sizes = [8, 8], strides = [1, 1]} : vector<8x96xf32> to vector<8x8xf32>
    %111 = vector.extract_strided_slice %39 {offsets = [0, 56], sizes = [8, 8], strides = [1, 1]} : vector<8x96xf32> to vector<8x8xf32>
    %112 = vector.extract_strided_slice %39 {offsets = [0, 88], sizes = [8, 8], strides = [1, 1]} : vector<8x96xf32> to vector<8x8xf32>
    "tpu.trace_start"() <{level = 10 : i32, message = "qd,kd->qk"}> : () -> ()
    %cst_40 = arith.constant dense<0.000000e+00> : vector<8x8xf32>
    %113 = tpu.matmul %110, %111, %cst_40 {dimension_numbers = #tpu.dot_dimension_numbers<[1], [1], [0], [0], [0, 0, 1, 0], [], []>} : vector<8x8xf32>, vector<8x8xf32>, vector<8x8xf32> -> vector<8x8xf32>
    "tpu.trace_stop"() : () -> ()
    %cst_41 = arith.constant 0.353553385 : f32
    %114 = vector.broadcast %cst_41 : f32 to vector<8x8xf32>
    %115 = arith.mulf %113, %114 : vector<8x8xf32>
    %116 = vector.broadcast %33 : vector<1x8xf32> to vector<8x8xf32>
    %117 = arith.addf %115, %116 : vector<8x8xf32>
    %cst_42 = arith.constant dense<0xFF800000> : vector<8xf32>
    %118 = vector.multi_reduction <maximumf>, %117, %cst_42 [1] : vector<8x8xf32> to vector<8xf32>
    %119 = vector.shape_cast %118 : vector<8xf32> to vector<8x1xf32>
    %120 = vector.broadcast %119 : vector<8x1xf32> to vector<8x8xf32>
    %121 = arith.subf %117, %120 : vector<8x8xf32>
    %122 = math.exp %121 : vector<8x8xf32>
    %cst_43 = arith.constant dense<0.000000e+00> : vector<8xf32>
    %123 = vector.multi_reduction <add>, %122, %cst_43 [1] : vector<8x8xf32> to vector<8xf32>
    %124 = vector.shape_cast %123 : vector<8xf32> to vector<8x1xf32>
    %125 = tpu.reciprocal %124 {approx = true} : vector<8x1xf32> -> vector<8x1xf32>
    %126 = vector.broadcast %125 : vector<8x1xf32> to vector<8x8xf32>
    %127 = arith.mulf %122, %126 : vector<8x8xf32>
    %cst_44 = arith.constant dense<0.000000e+00> : vector<8x8xf32>
    %128 = tpu.matmul %127, %112, %cst_44 {dimension_numbers = #tpu.dot_dimension_numbers<[1], [0], [0], [1], [0, 0, 1, 1], [], []>} : vector<8x8xf32>, vector<8x8xf32>, vector<8x8xf32> -> vector<8x8xf32>
    %c3 = arith.constant 3 : index
    %c0_45 = arith.constant 0 : index
    %c0_46 = arith.constant 0 : index
    %129 = vector.load %arg5[%c3, %c0_45, %c0_46] : memref<8x8x32xf32, #tpu.memory_space<vmem>>, vector<1x8x32xf32>
    %130 = vector.shape_cast %129 : vector<1x8x32xf32> to vector<8x32xf32>
    %cst_47 = arith.constant dense<0.000000e+00> : vector<8x32xf32>
    %131 = tpu.matmul %128, %130, %cst_47 {dimension_numbers = #tpu.dot_dimension_numbers<[1], [0], [0], [1], [0, 0, 1, 1], [], []>} : vector<8x8xf32>, vector<8x32xf32>, vector<8x32xf32> -> vector<8x32xf32>
    %132 = arith.addf %109, %131 : vector<8x32xf32>
    %133 = vector.extract_strided_slice %0 {offsets = [13, 0], sizes = [1, 32], strides = [1, 1]} : vector<32x128xf32> to vector<1x32xf32>
    %134 = vector.broadcast %133 : vector<1x32xf32> to vector<8x32xf32>
    %135 = arith.addf %132, %134 : vector<8x32xf32>
    %136 = arith.addf %32, %135 : vector<8x32xf32>
    %137 = vector.extract_strided_slice %0 {offsets = [16, 0], sizes = [1, 32], strides = [1, 1]} : vector<32x128xf32> to vector<1x32xf32>
    %138 = vector.extract_strided_slice %0 {offsets = [17, 0], sizes = [1, 32], strides = [1, 1]} : vector<32x128xf32> to vector<1x32xf32>
    %cst_48 = arith.constant dense<0.000000e+00> : vector<8xf32>
    %139 = vector.multi_reduction <add>, %136, %cst_48 [1] : vector<8x32xf32> to vector<8xf32>
    %140 = vector.shape_cast %139 : vector<8xf32> to vector<8x1xf32>
    %cst_49 = arith.constant 3.200000e+01 : f32
    %141 = vector.broadcast %cst_49 : f32 to vector<8x1xf32>
    %142 = arith.divf %140, %141 : vector<8x1xf32>
    %143 = vector.broadcast %142 : vector<8x1xf32> to vector<8x32xf32>
    %144 = arith.subf %136, %143 : vector<8x32xf32>
    %145 = arith.mulf %144, %144 : vector<8x32xf32>
    %cst_50 = arith.constant dense<0.000000e+00> : vector<8xf32>
    %146 = vector.multi_reduction <add>, %145, %cst_50 [1] : vector<8x32xf32> to vector<8xf32>
    %147 = vector.shape_cast %146 : vector<8xf32> to vector<8x1xf32>
    %cst_51 = arith.constant 3.200000e+01 : f32
    %148 = vector.broadcast %cst_51 : f32 to vector<8x1xf32>
    %149 = arith.divf %147, %148 : vector<8x1xf32>
    %cst_52 = arith.constant 9.99999974E-6 : f32
    %150 = vector.broadcast %cst_52 : f32 to vector<8x1xf32>
    %151 = arith.addf %149, %150 : vector<8x1xf32>
    %152 = math.rsqrt %151 : vector<8x1xf32>
    %153 = vector.broadcast %152 : vector<8x1xf32> to vector<8x32xf32>
    %154 = arith.mulf %144, %153 : vector<8x32xf32>
    %155 = vector.broadcast %137 : vector<1x32xf32> to vector<8x32xf32>
    %156 = arith.mulf %154, %155 : vector<8x32xf32>
    %157 = vector.broadcast %138 : vector<1x32xf32> to vector<8x32xf32>
    %158 = arith.addf %156, %157 : vector<8x32xf32>
    %c0_53 = arith.constant 0 : index
    %c0_54 = arith.constant 0 : index
    %c0_55 = arith.constant 0 : index
    %159 = vector.load %arg6[%c0_53, %c0_54, %c0_55] : memref<2x32x64xf32, #tpu.memory_space<vmem>>, vector<1x32x64xf32>
    %160 = vector.shape_cast %159 : vector<1x32x64xf32> to vector<32x64xf32>
    %cst_56 = arith.constant dense<0.000000e+00> : vector<8x64xf32>
    %161 = tpu.matmul %158, %160, %cst_56 {dimension_numbers = #tpu.dot_dimension_numbers<[1], [0], [0], [1], [0, 0, 1, 1], [], []>} : vector<8x32xf32>, vector<32x64xf32>, vector<8x64xf32> -> vector<8x64xf32>
    %162 = vector.extract_strided_slice %0 {offsets = [14, 0], sizes = [1, 64], strides = [1, 1]} : vector<32x128xf32> to vector<1x64xf32>
    %163 = vector.broadcast %162 : vector<1x64xf32> to vector<8x64xf32>
    %164 = arith.addf %161, %163 : vector<8x64xf32>
    %165 = arith.mulf %164, %164 : vector<8x64xf32>
    %166 = arith.mulf %164, %165 : vector<8x64xf32>
    %cst_57 = arith.constant 4.471500e-02 : f32
    %167 = vector.broadcast %cst_57 : f32 to vector<8x64xf32>
    %168 = arith.mulf %167, %166 : vector<8x64xf32>
    %169 = arith.addf %164, %168 : vector<8x64xf32>
    %cst_58 = arith.constant 0.797884583 : f32
    %170 = vector.broadcast %cst_58 : f32 to vector<8x64xf32>
    %171 = arith.mulf %170, %169 : vector<8x64xf32>
    %172 = math.tanh %171 : vector<8x64xf32>
    %cst_59 = arith.constant 1.000000e+00 : f32
    %173 = vector.broadcast %cst_59 : f32 to vector<8x64xf32>
    %174 = arith.addf %173, %172 : vector<8x64xf32>
    %cst_60 = arith.constant 5.000000e-01 : f32
    %175 = vector.broadcast %cst_60 : f32 to vector<8x64xf32>
    %176 = arith.mulf %175, %174 : vector<8x64xf32>
    %177 = arith.mulf %164, %176 : vector<8x64xf32>
    %c0_61 = arith.constant 0 : index
    %c0_62 = arith.constant 0 : index
    %c0_63 = arith.constant 0 : index
    %178 = vector.load %arg7[%c0_61, %c0_62, %c0_63] : memref<2x64x32xf32, #tpu.memory_space<vmem>>, vector<1x64x32xf32>
    %179 = vector.shape_cast %178 : vector<1x64x32xf32> to vector<64x32xf32>
    %cst_64 = arith.constant dense<0.000000e+00> : vector<8x32xf32>
    %180 = tpu.matmul %177, %179, %cst_64 {dimension_numbers = #tpu.dot_dimension_numbers<[1], [0], [0], [1], [0, 0, 1, 1], [], []>} : vector<8x64xf32>, vector<64x32xf32>, vector<8x32xf32> -> vector<8x32xf32>
    %181 = vector.extract_strided_slice %0 {offsets = [15, 0], sizes = [1, 32], strides = [1, 1]} : vector<32x128xf32> to vector<1x32xf32>
    %182 = vector.broadcast %181 : vector<1x32xf32> to vector<8x32xf32>
    %183 = arith.addf %180, %182 : vector<8x32xf32>
    %184 = arith.addf %158, %183 : vector<8x32xf32>
    %185 = vector.extract_strided_slice %0 {offsets = [18, 0], sizes = [1, 32], strides = [1, 1]} : vector<32x128xf32> to vector<1x32xf32>
    %186 = vector.extract_strided_slice %0 {offsets = [19, 0], sizes = [1, 32], strides = [1, 1]} : vector<32x128xf32> to vector<1x32xf32>
    %cst_65 = arith.constant dense<0.000000e+00> : vector<8xf32>
    %187 = vector.multi_reduction <add>, %184, %cst_65 [1] : vector<8x32xf32> to vector<8xf32>
    %188 = vector.shape_cast %187 : vector<8xf32> to vector<8x1xf32>
    %cst_66 = arith.constant 3.200000e+01 : f32
    %189 = vector.broadcast %cst_66 : f32 to vector<8x1xf32>
    %190 = arith.divf %188, %189 : vector<8x1xf32>
    %191 = vector.broadcast %190 : vector<8x1xf32> to vector<8x32xf32>
    %192 = arith.subf %184, %191 : vector<8x32xf32>
    %193 = arith.mulf %192, %192 : vector<8x32xf32>
    %cst_67 = arith.constant dense<0.000000e+00> : vector<8xf32>
    %194 = vector.multi_reduction <add>, %193, %cst_67 [1] : vector<8x32xf32> to vector<8xf32>
    %195 = vector.shape_cast %194 : vector<8xf32> to vector<8x1xf32>
    %cst_68 = arith.constant 3.200000e+01 : f32
    %196 = vector.broadcast %cst_68 : f32 to vector<8x1xf32>
    %197 = arith.divf %195, %196 : vector<8x1xf32>
    %cst_69 = arith.constant 9.99999974E-6 : f32
    %198 = vector.broadcast %cst_69 : f32 to vector<8x1xf32>
    %199 = arith.addf %197, %198 : vector<8x1xf32>
    %200 = math.rsqrt %199 : vector<8x1xf32>
    %201 = vector.broadcast %200 : vector<8x1xf32> to vector<8x32xf32>
    %202 = arith.mulf %192, %201 : vector<8x32xf32>
    %203 = vector.broadcast %185 : vector<1x32xf32> to vector<8x32xf32>
    %204 = arith.mulf %202, %203 : vector<8x32xf32>
    %205 = vector.broadcast %186 : vector<1x32xf32> to vector<8x32xf32>
    %206 = arith.addf %204, %205 : vector<8x32xf32>
    %c1_70 = arith.constant 1 : index
    %c0_71 = arith.constant 0 : index
    %c0_72 = arith.constant 0 : index
    %207 = vector.load %arg4[%c1_70, %c0_71, %c0_72] : memref<2x32x96xf32, #tpu.memory_space<vmem>>, vector<1x32x96xf32>
    %208 = vector.shape_cast %207 : vector<1x32x96xf32> to vector<32x96xf32>
    %cst_73 = arith.constant dense<0.000000e+00> : vector<8x96xf32>
    %209 = tpu.matmul %206, %208, %cst_73 {dimension_numbers = #tpu.dot_dimension_numbers<[1], [0], [0], [1], [0, 0, 1, 1], [], []>} : vector<8x32xf32>, vector<32x96xf32>, vector<8x96xf32> -> vector<8x96xf32>
    %210 = vector.extract_strided_slice %0 {offsets = [20, 0], sizes = [1, 96], strides = [1, 1]} : vector<32x128xf32> to vector<1x96xf32>
    %211 = vector.broadcast %210 : vector<1x96xf32> to vector<8x96xf32>
    %212 = arith.addf %209, %211 : vector<8x96xf32>
    %cst_74 = arith.constant 0.000000e+00 : f32
    %213 = vector.broadcast %cst_74 : f32 to vector<8x32xf32>
    %214 = vector.extract_strided_slice %212 {offsets = [0, 0], sizes = [8, 8], strides = [1, 1]} : vector<8x96xf32> to vector<8x8xf32>
    %215 = vector.extract_strided_slice %212 {offsets = [0, 32], sizes = [8, 8], strides = [1, 1]} : vector<8x96xf32> to vector<8x8xf32>
    %216 = vector.extract_strided_slice %212 {offsets = [0, 64], sizes = [8, 8], strides = [1, 1]} : vector<8x96xf32> to vector<8x8xf32>
    "tpu.trace_start"() <{level = 10 : i32, message = "qd,kd->qk"}> : () -> ()
    %cst_75 = arith.constant dense<0.000000e+00> : vector<8x8xf32>
    %217 = tpu.matmul %214, %215, %cst_75 {dimension_numbers = #tpu.dot_dimension_numbers<[1], [1], [0], [0], [0, 0, 1, 0], [], []>} : vector<8x8xf32>, vector<8x8xf32>, vector<8x8xf32> -> vector<8x8xf32>
    "tpu.trace_stop"() : () -> ()
    %cst_76 = arith.constant 0.353553385 : f32
    %218 = vector.broadcast %cst_76 : f32 to vector<8x8xf32>
    %219 = arith.mulf %217, %218 : vector<8x8xf32>
    %220 = vector.broadcast %33 : vector<1x8xf32> to vector<8x8xf32>
    %221 = arith.addf %219, %220 : vector<8x8xf32>
    %cst_77 = arith.constant dense<0xFF800000> : vector<8xf32>
    %222 = vector.multi_reduction <maximumf>, %221, %cst_77 [1] : vector<8x8xf32> to vector<8xf32>
    %223 = vector.shape_cast %222 : vector<8xf32> to vector<8x1xf32>
    %224 = vector.broadcast %223 : vector<8x1xf32> to vector<8x8xf32>
    %225 = arith.subf %221, %224 : vector<8x8xf32>
    %226 = math.exp %225 : vector<8x8xf32>
    %cst_78 = arith.constant dense<0.000000e+00> : vector<8xf32>
    %227 = vector.multi_reduction <add>, %226, %cst_78 [1] : vector<8x8xf32> to vector<8xf32>
    %228 = vector.shape_cast %227 : vector<8xf32> to vector<8x1xf32>
    %229 = tpu.reciprocal %228 {approx = true} : vector<8x1xf32> -> vector<8x1xf32>
    %230 = vector.broadcast %229 : vector<8x1xf32> to vector<8x8xf32>
    %231 = arith.mulf %226, %230 : vector<8x8xf32>
    %cst_79 = arith.constant dense<0.000000e+00> : vector<8x8xf32>
    %232 = tpu.matmul %231, %216, %cst_79 {dimension_numbers = #tpu.dot_dimension_numbers<[1], [0], [0], [1], [0, 0, 1, 1], [], []>} : vector<8x8xf32>, vector<8x8xf32>, vector<8x8xf32> -> vector<8x8xf32>
    %c4 = arith.constant 4 : index
    %c0_80 = arith.constant 0 : index
    %c0_81 = arith.constant 0 : index
    %233 = vector.load %arg5[%c4, %c0_80, %c0_81] : memref<8x8x32xf32, #tpu.memory_space<vmem>>, vector<1x8x32xf32>
    %234 = vector.shape_cast %233 : vector<1x8x32xf32> to vector<8x32xf32>
    %cst_82 = arith.constant dense<0.000000e+00> : vector<8x32xf32>
    %235 = tpu.matmul %232, %234, %cst_82 {dimension_numbers = #tpu.dot_dimension_numbers<[1], [0], [0], [1], [0, 0, 1, 1], [], []>} : vector<8x8xf32>, vector<8x32xf32>, vector<8x32xf32> -> vector<8x32xf32>
    %236 = arith.addf %213, %235 : vector<8x32xf32>
    %237 = vector.extract_strided_slice %212 {offsets = [0, 8], sizes = [8, 8], strides = [1, 1]} : vector<8x96xf32> to vector<8x8xf32>
    %238 = vector.extract_strided_slice %212 {offsets = [0, 40], sizes = [8, 8], strides = [1, 1]} : vector<8x96xf32> to vector<8x8xf32>
    %239 = vector.extract_strided_slice %212 {offsets = [0, 72], sizes = [8, 8], strides = [1, 1]} : vector<8x96xf32> to vector<8x8xf32>
    "tpu.trace_start"() <{level = 10 : i32, message = "qd,kd->qk"}> : () -> ()
    %cst_83 = arith.constant dense<0.000000e+00> : vector<8x8xf32>
    %240 = tpu.matmul %237, %238, %cst_83 {dimension_numbers = #tpu.dot_dimension_numbers<[1], [1], [0], [0], [0, 0, 1, 0], [], []>} : vector<8x8xf32>, vector<8x8xf32>, vector<8x8xf32> -> vector<8x8xf32>
    "tpu.trace_stop"() : () -> ()
    %cst_84 = arith.constant 0.353553385 : f32
    %241 = vector.broadcast %cst_84 : f32 to vector<8x8xf32>
    %242 = arith.mulf %240, %241 : vector<8x8xf32>
    %243 = vector.broadcast %33 : vector<1x8xf32> to vector<8x8xf32>
    %244 = arith.addf %242, %243 : vector<8x8xf32>
    %cst_85 = arith.constant dense<0xFF800000> : vector<8xf32>
    %245 = vector.multi_reduction <maximumf>, %244, %cst_85 [1] : vector<8x8xf32> to vector<8xf32>
    %246 = vector.shape_cast %245 : vector<8xf32> to vector<8x1xf32>
    %247 = vector.broadcast %246 : vector<8x1xf32> to vector<8x8xf32>
    %248 = arith.subf %244, %247 : vector<8x8xf32>
    %249 = math.exp %248 : vector<8x8xf32>
    %cst_86 = arith.constant dense<0.000000e+00> : vector<8xf32>
    %250 = vector.multi_reduction <add>, %249, %cst_86 [1] : vector<8x8xf32> to vector<8xf32>
    %251 = vector.shape_cast %250 : vector<8xf32> to vector<8x1xf32>
    %252 = tpu.reciprocal %251 {approx = true} : vector<8x1xf32> -> vector<8x1xf32>
    %253 = vector.broadcast %252 : vector<8x1xf32> to vector<8x8xf32>
    %254 = arith.mulf %249, %253 : vector<8x8xf32>
    %cst_87 = arith.constant dense<0.000000e+00> : vector<8x8xf32>
    %255 = tpu.matmul %254, %239, %cst_87 {dimension_numbers = #tpu.dot_dimension_numbers<[1], [0], [0], [1], [0, 0, 1, 1], [], []>} : vector<8x8xf32>, vector<8x8xf32>, vector<8x8xf32> -> vector<8x8xf32>
    %c5 = arith.constant 5 : index
    %c0_88 = arith.constant 0 : index
    %c0_89 = arith.constant 0 : index
    %256 = vector.load %arg5[%c5, %c0_88, %c0_89] : memref<8x8x32xf32, #tpu.memory_space<vmem>>, vector<1x8x32xf32>
    %257 = vector.shape_cast %256 : vector<1x8x32xf32> to vector<8x32xf32>
    %cst_90 = arith.constant dense<0.000000e+00> : vector<8x32xf32>
    %258 = tpu.matmul %255, %257, %cst_90 {dimension_numbers = #tpu.dot_dimension_numbers<[1], [0], [0], [1], [0, 0, 1, 1], [], []>} : vector<8x8xf32>, vector<8x32xf32>, vector<8x32xf32> -> vector<8x32xf32>
    %259 = arith.addf %236, %258 : vector<8x32xf32>
    %260 = vector.extract_strided_slice %212 {offsets = [0, 16], sizes = [8, 8], strides = [1, 1]} : vector<8x96xf32> to vector<8x8xf32>
    %261 = vector.extract_strided_slice %212 {offsets = [0, 48], sizes = [8, 8], strides = [1, 1]} : vector<8x96xf32> to vector<8x8xf32>
    %262 = vector.extract_strided_slice %212 {offsets = [0, 80], sizes = [8, 8], strides = [1, 1]} : vector<8x96xf32> to vector<8x8xf32>
    "tpu.trace_start"() <{level = 10 : i32, message = "qd,kd->qk"}> : () -> ()
    %cst_91 = arith.constant dense<0.000000e+00> : vector<8x8xf32>
    %263 = tpu.matmul %260, %261, %cst_91 {dimension_numbers = #tpu.dot_dimension_numbers<[1], [1], [0], [0], [0, 0, 1, 0], [], []>} : vector<8x8xf32>, vector<8x8xf32>, vector<8x8xf32> -> vector<8x8xf32>
    "tpu.trace_stop"() : () -> ()
    %cst_92 = arith.constant 0.353553385 : f32
    %264 = vector.broadcast %cst_92 : f32 to vector<8x8xf32>
    %265 = arith.mulf %263, %264 : vector<8x8xf32>
    %266 = vector.broadcast %33 : vector<1x8xf32> to vector<8x8xf32>
    %267 = arith.addf %265, %266 : vector<8x8xf32>
    %cst_93 = arith.constant dense<0xFF800000> : vector<8xf32>
    %268 = vector.multi_reduction <maximumf>, %267, %cst_93 [1] : vector<8x8xf32> to vector<8xf32>
    %269 = vector.shape_cast %268 : vector<8xf32> to vector<8x1xf32>
    %270 = vector.broadcast %269 : vector<8x1xf32> to vector<8x8xf32>
    %271 = arith.subf %267, %270 : vector<8x8xf32>
    %272 = math.exp %271 : vector<8x8xf32>
    %cst_94 = arith.constant dense<0.000000e+00> : vector<8xf32>
    %273 = vector.multi_reduction <add>, %272, %cst_94 [1] : vector<8x8xf32> to vector<8xf32>
    %274 = vector.shape_cast %273 : vector<8xf32> to vector<8x1xf32>
    %275 = tpu.reciprocal %274 {approx = true} : vector<8x1xf32> -> vector<8x1xf32>
    %276 = vector.broadcast %275 : vector<8x1xf32> to vector<8x8xf32>
    %277 = arith.mulf %272, %276 : vector<8x8xf32>
    %cst_95 = arith.constant dense<0.000000e+00> : vector<8x8xf32>
    %278 = tpu.matmul %277, %262, %cst_95 {dimension_numbers = #tpu.dot_dimension_numbers<[1], [0], [0], [1], [0, 0, 1, 1], [], []>} : vector<8x8xf32>, vector<8x8xf32>, vector<8x8xf32> -> vector<8x8xf32>
    %c6 = arith.constant 6 : index
    %c0_96 = arith.constant 0 : index
    %c0_97 = arith.constant 0 : index
    %279 = vector.load %arg5[%c6, %c0_96, %c0_97] : memref<8x8x32xf32, #tpu.memory_space<vmem>>, vector<1x8x32xf32>
    %280 = vector.shape_cast %279 : vector<1x8x32xf32> to vector<8x32xf32>
    %cst_98 = arith.constant dense<0.000000e+00> : vector<8x32xf32>
    %281 = tpu.matmul %278, %280, %cst_98 {dimension_numbers = #tpu.dot_dimension_numbers<[1], [0], [0], [1], [0, 0, 1, 1], [], []>} : vector<8x8xf32>, vector<8x32xf32>, vector<8x32xf32> -> vector<8x32xf32>
    %282 = arith.addf %259, %281 : vector<8x32xf32>
    %283 = vector.extract_strided_slice %212 {offsets = [0, 24], sizes = [8, 8], strides = [1, 1]} : vector<8x96xf32> to vector<8x8xf32>
    %284 = vector.extract_strided_slice %212 {offsets = [0, 56], sizes = [8, 8], strides = [1, 1]} : vector<8x96xf32> to vector<8x8xf32>
    %285 = vector.extract_strided_slice %212 {offsets = [0, 88], sizes = [8, 8], strides = [1, 1]} : vector<8x96xf32> to vector<8x8xf32>
    "tpu.trace_start"() <{level = 10 : i32, message = "qd,kd->qk"}> : () -> ()
    %cst_99 = arith.constant dense<0.000000e+00> : vector<8x8xf32>
    %286 = tpu.matmul %283, %284, %cst_99 {dimension_numbers = #tpu.dot_dimension_numbers<[1], [1], [0], [0], [0, 0, 1, 0], [], []>} : vector<8x8xf32>, vector<8x8xf32>, vector<8x8xf32> -> vector<8x8xf32>
    "tpu.trace_stop"() : () -> ()
    %cst_100 = arith.constant 0.353553385 : f32
    %287 = vector.broadcast %cst_100 : f32 to vector<8x8xf32>
    %288 = arith.mulf %286, %287 : vector<8x8xf32>
    %289 = vector.broadcast %33 : vector<1x8xf32> to vector<8x8xf32>
    %290 = arith.addf %288, %289 : vector<8x8xf32>
    %cst_101 = arith.constant dense<0xFF800000> : vector<8xf32>
    %291 = vector.multi_reduction <maximumf>, %290, %cst_101 [1] : vector<8x8xf32> to vector<8xf32>
    %292 = vector.shape_cast %291 : vector<8xf32> to vector<8x1xf32>
    %293 = vector.broadcast %292 : vector<8x1xf32> to vector<8x8xf32>
    %294 = arith.subf %290, %293 : vector<8x8xf32>
    %295 = math.exp %294 : vector<8x8xf32>
    %cst_102 = arith.constant dense<0.000000e+00> : vector<8xf32>
    %296 = vector.multi_reduction <add>, %295, %cst_102 [1] : vector<8x8xf32> to vector<8xf32>
    %297 = vector.shape_cast %296 : vector<8xf32> to vector<8x1xf32>
    %298 = tpu.reciprocal %297 {approx = true} : vector<8x1xf32> -> vector<8x1xf32>
    %299 = vector.broadcast %298 : vector<8x1xf32> to vector<8x8xf32>
    %300 = arith.mulf %295, %299 : vector<8x8xf32>
    %cst_103 = arith.constant dense<0.000000e+00> : vector<8x8xf32>
    %301 = tpu.matmul %300, %285, %cst_103 {dimension_numbers = #tpu.dot_dimension_numbers<[1], [0], [0], [1], [0, 0, 1, 1], [], []>} : vector<8x8xf32>, vector<8x8xf32>, vector<8x8xf32> -> vector<8x8xf32>
    %c7 = arith.constant 7 : index
    %c0_104 = arith.constant 0 : index
    %c0_105 = arith.constant 0 : index
    %302 = vector.load %arg5[%c7, %c0_104, %c0_105] : memref<8x8x32xf32, #tpu.memory_space<vmem>>, vector<1x8x32xf32>
    %303 = vector.shape_cast %302 : vector<1x8x32xf32> to vector<8x32xf32>
    %cst_106 = arith.constant dense<0.000000e+00> : vector<8x32xf32>
    %304 = tpu.matmul %301, %303, %cst_106 {dimension_numbers = #tpu.dot_dimension_numbers<[1], [0], [0], [1], [0, 0, 1, 1], [], []>} : vector<8x8xf32>, vector<8x32xf32>, vector<8x32xf32> -> vector<8x32xf32>
    %305 = arith.addf %282, %304 : vector<8x32xf32>
    %306 = vector.extract_strided_slice %0 {offsets = [21, 0], sizes = [1, 32], strides = [1, 1]} : vector<32x128xf32> to vector<1x32xf32>
    %307 = vector.broadcast %306 : vector<1x32xf32> to vector<8x32xf32>
    %308 = arith.addf %305, %307 : vector<8x32xf32>
    %309 = arith.addf %206, %308 : vector<8x32xf32>
    %310 = vector.extract_strided_slice %0 {offsets = [24, 0], sizes = [1, 32], strides = [1, 1]} : vector<32x128xf32> to vector<1x32xf32>
    %311 = vector.extract_strided_slice %0 {offsets = [25, 0], sizes = [1, 32], strides = [1, 1]} : vector<32x128xf32> to vector<1x32xf32>
    %cst_107 = arith.constant dense<0.000000e+00> : vector<8xf32>
    %312 = vector.multi_reduction <add>, %309, %cst_107 [1] : vector<8x32xf32> to vector<8xf32>
    %313 = vector.shape_cast %312 : vector<8xf32> to vector<8x1xf32>
    %cst_108 = arith.constant 3.200000e+01 : f32
    %314 = vector.broadcast %cst_108 : f32 to vector<8x1xf32>
    %315 = arith.divf %313, %314 : vector<8x1xf32>
    %316 = vector.broadcast %315 : vector<8x1xf32> to vector<8x32xf32>
    %317 = arith.subf %309, %316 : vector<8x32xf32>
    %318 = arith.mulf %317, %317 : vector<8x32xf32>
    %cst_109 = arith.constant dense<0.000000e+00> : vector<8xf32>
    %319 = vector.multi_reduction <add>, %318, %cst_109 [1] : vector<8x32xf32> to vector<8xf32>
    %320 = vector.shape_cast %319 : vector<8xf32> to vector<8x1xf32>
    %cst_110 = arith.constant 3.200000e+01 : f32
    %321 = vector.broadcast %cst_110 : f32 to vector<8x1xf32>
    %322 = arith.divf %320, %321 : vector<8x1xf32>
    %cst_111 = arith.constant 9.99999974E-6 : f32
    %323 = vector.broadcast %cst_111 : f32 to vector<8x1xf32>
    %324 = arith.addf %322, %323 : vector<8x1xf32>
    %325 = math.rsqrt %324 : vector<8x1xf32>
    %326 = vector.broadcast %325 : vector<8x1xf32> to vector<8x32xf32>
    %327 = arith.mulf %317, %326 : vector<8x32xf32>
    %328 = vector.broadcast %310 : vector<1x32xf32> to vector<8x32xf32>
    %329 = arith.mulf %327, %328 : vector<8x32xf32>
    %330 = vector.broadcast %311 : vector<1x32xf32> to vector<8x32xf32>
    %331 = arith.addf %329, %330 : vector<8x32xf32>
    %c1_112 = arith.constant 1 : index
    %c0_113 = arith.constant 0 : index
    %c0_114 = arith.constant 0 : index
    %332 = vector.load %arg6[%c1_112, %c0_113, %c0_114] : memref<2x32x64xf32, #tpu.memory_space<vmem>>, vector<1x32x64xf32>
    %333 = vector.shape_cast %332 : vector<1x32x64xf32> to vector<32x64xf32>
    %cst_115 = arith.constant dense<0.000000e+00> : vector<8x64xf32>
    %334 = tpu.matmul %331, %333, %cst_115 {dimension_numbers = #tpu.dot_dimension_numbers<[1], [0], [0], [1], [0, 0, 1, 1], [], []>} : vector<8x32xf32>, vector<32x64xf32>, vector<8x64xf32> -> vector<8x64xf32>
    %335 = vector.extract_strided_slice %0 {offsets = [22, 0], sizes = [1, 64], strides = [1, 1]} : vector<32x128xf32> to vector<1x64xf32>
    %336 = vector.broadcast %335 : vector<1x64xf32> to vector<8x64xf32>
    %337 = arith.addf %334, %336 : vector<8x64xf32>
    %338 = arith.mulf %337, %337 : vector<8x64xf32>
    %339 = arith.mulf %337, %338 : vector<8x64xf32>
    %cst_116 = arith.constant 4.471500e-02 : f32
    %340 = vector.broadcast %cst_116 : f32 to vector<8x64xf32>
    %341 = arith.mulf %340, %339 : vector<8x64xf32>
    %342 = arith.addf %337, %341 : vector<8x64xf32>
    %cst_117 = arith.constant 0.797884583 : f32
    %343 = vector.broadcast %cst_117 : f32 to vector<8x64xf32>
    %344 = arith.mulf %343, %342 : vector<8x64xf32>
    %345 = math.tanh %344 : vector<8x64xf32>
    %cst_118 = arith.constant 1.000000e+00 : f32
    %346 = vector.broadcast %cst_118 : f32 to vector<8x64xf32>
    %347 = arith.addf %346, %345 : vector<8x64xf32>
    %cst_119 = arith.constant 5.000000e-01 : f32
    %348 = vector.broadcast %cst_119 : f32 to vector<8x64xf32>
    %349 = arith.mulf %348, %347 : vector<8x64xf32>
    %350 = arith.mulf %337, %349 : vector<8x64xf32>
    %c1_120 = arith.constant 1 : index
    %c0_121 = arith.constant 0 : index
    %c0_122 = arith.constant 0 : index
    %351 = vector.load %arg7[%c1_120, %c0_121, %c0_122] : memref<2x64x32xf32, #tpu.memory_space<vmem>>, vector<1x64x32xf32>
    %352 = vector.shape_cast %351 : vector<1x64x32xf32> to vector<64x32xf32>
    %cst_123 = arith.constant dense<0.000000e+00> : vector<8x32xf32>
    %353 = tpu.matmul %350, %352, %cst_123 {dimension_numbers = #tpu.dot_dimension_numbers<[1], [0], [0], [1], [0, 0, 1, 1], [], []>} : vector<8x64xf32>, vector<64x32xf32>, vector<8x32xf32> -> vector<8x32xf32>
    %354 = vector.extract_strided_slice %0 {offsets = [23, 0], sizes = [1, 32], strides = [1, 1]} : vector<32x128xf32> to vector<1x32xf32>
    %355 = vector.broadcast %354 : vector<1x32xf32> to vector<8x32xf32>
    %356 = arith.addf %353, %355 : vector<8x32xf32>
    %357 = arith.addf %331, %356 : vector<8x32xf32>
    %358 = vector.extract_strided_slice %0 {offsets = [26, 0], sizes = [1, 32], strides = [1, 1]} : vector<32x128xf32> to vector<1x32xf32>
    %359 = vector.extract_strided_slice %0 {offsets = [27, 0], sizes = [1, 32], strides = [1, 1]} : vector<32x128xf32> to vector<1x32xf32>
    %cst_124 = arith.constant dense<0.000000e+00> : vector<8xf32>
    %360 = vector.multi_reduction <add>, %357, %cst_124 [1] : vector<8x32xf32> to vector<8xf32>
    %361 = vector.shape_cast %360 : vector<8xf32> to vector<8x1xf32>
    %cst_125 = arith.constant 3.200000e+01 : f32
    %362 = vector.broadcast %cst_125 : f32 to vector<8x1xf32>
    %363 = arith.divf %361, %362 : vector<8x1xf32>
    %364 = vector.broadcast %363 : vector<8x1xf32> to vector<8x32xf32>
    %365 = arith.subf %357, %364 : vector<8x32xf32>
    %366 = arith.mulf %365, %365 : vector<8x32xf32>
    %cst_126 = arith.constant dense<0.000000e+00> : vector<8xf32>
    %367 = vector.multi_reduction <add>, %366, %cst_126 [1] : vector<8x32xf32> to vector<8xf32>
    %368 = vector.shape_cast %367 : vector<8xf32> to vector<8x1xf32>
    %cst_127 = arith.constant 3.200000e+01 : f32
    %369 = vector.broadcast %cst_127 : f32 to vector<8x1xf32>
    %370 = arith.divf %368, %369 : vector<8x1xf32>
    %cst_128 = arith.constant 9.99999974E-6 : f32
    %371 = vector.broadcast %cst_128 : f32 to vector<8x1xf32>
    %372 = arith.addf %370, %371 : vector<8x1xf32>
    %373 = math.rsqrt %372 : vector<8x1xf32>
    %374 = vector.broadcast %373 : vector<8x1xf32> to vector<8x32xf32>
    %375 = arith.mulf %365, %374 : vector<8x32xf32>
    %376 = vector.broadcast %358 : vector<1x32xf32> to vector<8x32xf32>
    %377 = arith.mulf %375, %376 : vector<8x32xf32>
    %378 = vector.broadcast %359 : vector<1x32xf32> to vector<8x32xf32>
    %379 = arith.addf %377, %378 : vector<8x32xf32>
    %c0_129 = arith.constant 0 : index
    %c0_130 = arith.constant 0 : index
    %380 = vector.load %arg3[%c0_129, %c0_130] : memref<32x128xf32, #tpu.memory_space<vmem>>, vector<32x128xf32>
    %cst_131 = arith.constant dense<0.000000e+00> : vector<8x128xf32>
    %381 = tpu.matmul %379, %380, %cst_131 {dimension_numbers = #tpu.dot_dimension_numbers<[1], [0], [0], [1], [0, 0, 1, 1], [], []>} : vector<8x32xf32>, vector<32x128xf32>, vector<8x128xf32> -> vector<8x128xf32>
    %382 = vector.extract_strided_slice %0 {offsets = [11, 0], sizes = [1, 128], strides = [1, 1]} : vector<32x128xf32> to vector<1x128xf32>
    %383 = vector.broadcast %382 : vector<1x128xf32> to vector<8x128xf32>
    %384 = arith.addf %381, %383 : vector<8x128xf32>
    %385 = arith.negf %384 : vector<8x128xf32>
    %386 = math.exp %385 : vector<8x128xf32>
    %cst_132 = arith.constant 1.000000e+00 : f32
    %387 = vector.broadcast %cst_132 : f32 to vector<8x128xf32>
    %388 = arith.addf %387, %386 : vector<8x128xf32>
    %389 = arith.divf %387, %388 : vector<8x128xf32>
    %c0_133 = arith.constant 0 : index
    %c0_134 = arith.constant 0 : index
    %390 = vector.load %arg8[%c0_133, %c0_134] : memref<8x128xf32, #tpu.memory_space<vmem>>, vector<8x128xf32>
    tpu.vector_store %arg8[%c0_133, %c0_134], %389 {strides = array<i32>} : memref<8x128xf32, #tpu.memory_space<vmem>>, vector<8x128xf32>,
    return
  }
}

</mosaic_0001>

<llo_original>
// kernel: tpu_custom_call.1
$region0: #{tpu_custom_call.1}
  #allocation0 [shape = 'u32[]', space=smem, size = 0x4, offset = 0x4, fixed_abs, tag = 'smem constant byte address 0x4 - core index']
  #allocation1 [shape = 'u32[72,128]{1,0:T(1,128)}', space=vmem, size = 0x9000, scoped, tag = 'internal scratch']
  %s0 = inlined_call_operand.vmem [shape: s32[8,1], index: 0, kind: input, shape index: {}]
  %s1 = inlined_call_operand.vmem [shape: f32[128,32], index: 1, kind: input, shape index: {}]
  %s2 = inlined_call_operand.vmem [shape: f32[32,128], index: 2, kind: input, shape index: {}]
  %s3 = inlined_call_operand.vmem [shape: f32[32,128], index: 3, kind: input, shape index: {}]
  %s4 = inlined_call_operand.vmem [shape: f32[2,32,96], index: 4, kind: input, shape index: {}]
  %s5 = inlined_call_operand.vmem [shape: f32[8,8,32], index: 5, kind: input, shape index: {}]
  %s6 = inlined_call_operand.vmem [shape: f32[2,32,64], index: 6, kind: input, shape index: {}]
  %s7 = inlined_call_operand.vmem [shape: f32[2,64,32], index: 7, kind: input, shape index: {}]
  %s8 = inlined_call_operand.hbm [shape: f32[8,128], index: 8, kind: output, shape index: {}]
  %s9 = sld [smem:[#allocation0]]
  $region42: #{tpu_custom_call.1} parent=0
    _
  %s11 = ssub.s32 1, %s9
  %s12 = scalar_select 0, %s11, %s9
  $region1: #{tpu_custom_call.1} parent=0
    #allocation2 [shape = 'u8[4096]{0}', space=vmem, size = 0x1000, scoped, tag = 'output window, operand 0, single buffered']
    #allocation3 [shape = 's32[1]{0}', space=sflag, size = 0x4, scoped, tag = 'scoped memory for tpu_custom_call.1']
    %13 = vsyncpa [#allocation3], 0
    // Predicated region
    $region2: #{tpu_custom_call.1} parent=1 // pred_check
      _
    $region3: #{tpu_custom_call.1} parent=1 // pred_check_branch
      %15 = sbr.rel (0) target = $region5
    $region4: #{tpu_custom_call.1} parent=1 // pred_region
      _
    $region5: #{tpu_custom_call.1} parent=1 // pred_fallthru
      _
    // Predicated region
    $region6: #{tpu_custom_call.1} parent=1 // pred_check
      _
    $region7: #{tpu_custom_call.1} parent=1 // pred_check_branch
      %17 = sbr.rel (0) target = $region9
    $region8: #{tpu_custom_call.1} parent=1 // pred_region
      _
    $region9: #{tpu_custom_call.1} parent=1 // pred_fallthru
      _
    // Predicated region
    $region10: #{tpu_custom_call.1} parent=1 // pred_check
      _
    $region11: #{tpu_custom_call.1} parent=1 // pred_check_branch
      %19 = sbr.rel (0) target = $region13
    $region12: #{tpu_custom_call.1} parent=1 // pred_region
      _
    $region13: #{tpu_custom_call.1} parent=1 // pred_fallthru
      _
    // Predicated region
    $region14: #{tpu_custom_call.1} parent=1 // pred_check
      _
    $region15: #{tpu_custom_call.1} parent=1 // pred_check_branch
      %21 = sbr.rel (0) target = $region17
    $region16: #{tpu_custom_call.1} parent=1 // pred_region
      _
    $region17: #{tpu_custom_call.1} parent=1 // pred_fallthru
      _
    // Predicated region
    $region18: #{tpu_custom_call.1} parent=1 // pred_check
      _
    $region19: #{tpu_custom_call.1} parent=1 // pred_check_branch
      %23 = sbr.rel (0) target = $region21
    $region20: #{tpu_custom_call.1} parent=1 // pred_region
      _
    $region21: #{tpu_custom_call.1} parent=1 // pred_fallthru
      _
    // Predicated region
    $region22: #{tpu_custom_call.1} parent=1 // pred_check
      _
    $region23: #{tpu_custom_call.1} parent=1 // pred_check_branch
      %25 = sbr.rel (0) target = $region25
    $region24: #{tpu_custom_call.1} parent=1 // pred_region
      _
    $region25: #{tpu_custom_call.1} parent=1 // pred_fallthru
      _
    // Predicated region
    $region26: #{tpu_custom_call.1} parent=1 // pred_check
      _
    $region27: #{tpu_custom_call.1} parent=1 // pred_check_branch
      %27 = sbr.rel (0) target = $region29
    $region28: #{tpu_custom_call.1} parent=1 // pred_region
      _
    $region29: #{tpu_custom_call.1} parent=1 // pred_fallthru
      _
    // Predicated region
    $region30: #{tpu_custom_call.1} parent=1 // pred_check
      _
    $region31: #{tpu_custom_call.1} parent=1 // pred_check_branch
      %29 = sbr.rel (0) target = $region33
    $region32: #{tpu_custom_call.1} parent=1 // pred_region
      _
    $region33: #{tpu_custom_call.1} parent=1 // pred_fallthru
      _
    %v30 = vld [vmem:[%s2] sm:$0xff]
    %v31 = vld [vmem:[%s2 + $0x8] sm:$0xff]
    %v32 = vld [vmem:[%s2 + $0x10] sm:$0xff]
    %v33 = vld [vmem:[%s2 + $0x18] sm:$0xff]
    %v34 = vld [vmem:[%s0] sm:$0xff]
    %v35 = vlaneseq
    %v36 = vand.u32 %v35, 127
    %37 = vset.pattern.permute.xlu0 0
    %38 = vperm.xlu0 %37, %v34
    %v39 = vpop.permute.xlu0 %38
    %vm40 = vcmp.eq.s32.totalorder %v36, %v39
    %v41 = vsel %vm40, 1, 0
    %v42 = vcvt.s32.f32 %v41
    %v43 = vld [vmem:[%s1] sm:$0xff]
    %v44 = vld [vmem:[%s1 + $0x8] sm:$0xff]
    %v45 = vld [vmem:[%s1 + $0x10] sm:$0xff]
    %v46 = vld [vmem:[%s1 + $0x18] sm:$0xff]
    %v47 = vld [vmem:[%s1 + $0x20] sm:$0xff]
    %v48 = vld [vmem:[%s1 + $0x28] sm:$0xff]
    %v49 = vld [vmem:[%s1 + $0x30] sm:$0xff]
    %v50 = vld [vmem:[%s1 + $0x38] sm:$0xff]
    %v51 = vld [vmem:[%s1 + $0x40] sm:$0xff]
    %v52 = vld [vmem:[%s1 + $0x48] sm:$0xff]
    %v53 = vld [vmem:[%s1 + $0x50] sm:$0xff]
    %v54 = vld [vmem:[%s1 + $0x58] sm:$0xff]
    %v55 = vld [vmem:[%s1 + $0x60] sm:$0xff]
    %v56 = vld [vmem:[%s1 + $0x68] sm:$0xff]
    %v57 = vld [vmem:[%s1 + $0x70] sm:$0xff]
    %v58 = vld [vmem:[%s1 + $0x78] sm:$0xff]
    %59 = vmatpush.msra.mxu0 %v58
    %60 = vmatpush.msra.mxu0 %v57
    %61 = vmatpush.msra.mxu0 %v56
    %62 = vmatpush.msra.mxu0 %v55
    %63 = vmatpush.msra.mxu0 %v54
    %64 = vmatpush.msra.mxu0 %v53
    %65 = vmatpush.msra.mxu0 %v52
    %66 = vmatpush.msra.mxu0 %v51
    %67 = vmatpush.msra.mxu0 %v50
    %68 = vmatpush.msra.mxu0 %v49
    %69 = vmatpush.msra.mxu0 %v48
    %70 = vmatpush.msra.mxu0 %v47
    %71 = vmatpush.msra.mxu0 %v46
    %72 = vmatpush.msra.mxu0 %v45
    %73 = vmatpush.msra.mxu0 %v44
    %74 = vmatpush.msra.mxu0 %v43
    %75 = vmatmul.f32.gmra.mxu0 %v42
    %v76 = vpop.f32.mrf.mxu0
    %v77 = vadd.f32 %v30, %v76
    %78 = vdwg.mxu0
    %vm79 = vcmask 261120
    %v80 = vsel %vm79, %v77, 0.0
    %81 = vadd.xlane.f32.xlu0 %v80
    %v82 = vpop.xlane.xlu0 %81
    %v83 = vrcp.pop 32.0
    %v84 = vmul.f32 32.0, %v83
    %v85 = vsub.f32 1.0, %v84
    %v86 = vmul.f32 %v83, %v85
    %v87 = vadd.f32 %v83, %v86
    %vm88 = vweird.f32 %v83
    %v89 = vsel %vm88, %v83, %v87
    %v90 = vmul.f32 %v82, %v89
    %v91 = vsub.f32 %v77, %v90
    %v92 = vmul.f32 %v91, %v91
    %v93 = vsel %vm79, %v92, 0.0
    %94 = vadd.xlane.f32.xlu0 %v93
    %v95 = vpop.xlane.xlu0 %94
    %v96 = vmul.f32 %v95, %v89
    %v97 = vadd.f32 %v96, 1e-05
    %v98 = vrsqrt.pop %v97
    %v99 = vmul.f32 %v98, %v97
    %v100 = vmul.f32 %v99, %v98
    %v101 = vmul.f32 0.5, %v100
    %v102 = vsub.f32 1.5, %v101
    %v103 = vmul.f32 %v98, %v102
    %vm104 = vweird.f32 %v97
    %vm105 = vweird.f32 %v98
    %vm106 = vmor %vm104, %vm105
    %v107 = vsel %vm106, %v98, %v103
    %v108 = vmul.f32 %v91, %v107
    %v109 = vperm.slane %v31, 1
    %v110 = vmul.f32 %v108, %v109
    %v111 = vperm.slane %v31, 2
    %v112 = vadd.f32 %v110, %v111
    %v113 = vld [vmem:[%s4] sm:$0xff]
    %v114 = vld [vmem:[%s4 + $0x8] sm:$0xff]
    %v115 = vld [vmem:[%s4 + $0x10] sm:$0xff]
    %v116 = vld [vmem:[%s4 + $0x18] sm:$0xff]
    %v117 = vperm.slane %v31, 4
    %v119 = vsel %vm79, %v112, 0
    %121 = vmatpush.msra.mxu0 0.0
    %122 = vmatpush.msra.mxu0 0.0
    %123 = vmatpush.msra.mxu0 0.0
    %124 = vmatpush.msra.mxu0 0.0
    %125 = vmatpush.msra.mxu0 0.0
    %126 = vmatpush.msra.mxu0 0.0
    %127 = vmatpush.msra.mxu0 0.0
    %128 = vmatpush.msra.mxu0 0.0
    %129 = vmatpush.msra.mxu0 0.0
    %130 = vmatpush.msra.mxu0 0.0
    %131 = vmatpush.msra.mxu0 0.0
    %132 = vmatpush.msra.mxu0 0.0
    %133 = vmatpush.msra.mxu0 %v116
    %134 = vmatpush.msra.mxu0 %v115
    %135 = vmatpush.msra.mxu0 %v114
    %136 = vmatpush.msra.mxu0 %v113
    %137 = vmatmul.f32.gmra.mxu0 %v119
    %v138 = vpop.f32.mrf.mxu0
    %v139 = vadd.f32 %v117, %v138
    %140 = vdwg.mxu0
    %142 = vrot.lane.b32.xlu0 %v139, 96
    %v143 = vpop.permute.xlu0 %142
    %vm144 = vcmask 64512
    %v145 = vsel %vm144, %v139, 0
    %v147 = vsel %vm144, %v143, 0
    %149 = vmatpush.xpose.msra.mxu0 0.0
    %150 = vmatpush.xpose.msra.mxu0 0.0
    %151 = vmatpush.xpose.msra.mxu0 0.0
    %152 = vmatpush.xpose.msra.mxu0 0.0
    %153 = vmatpush.xpose.msra.mxu0 0.0
    %154 = vmatpush.xpose.msra.mxu0 0.0
    %155 = vmatpush.xpose.msra.mxu0 0.0
    %156 = vmatpush.xpose.msra.mxu0 0.0
    %157 = vmatpush.xpose.msra.mxu0 0.0
    %158 = vmatpush.xpose.msra.mxu0 0.0
    %159 = vmatpush.xpose.msra.mxu0 0.0
    %160 = vmatpush.xpose.msra.mxu0 0.0
    %161 = vmatpush.xpose.msra.mxu0 0.0
    %162 = vmatpush.xpose.msra.mxu0 0.0
    %163 = vmatpush.xpose.msra.mxu0 0.0
    %164 = vmatpush.xpose.msra.mxu0 %v147
    %165 = vmatmul.f32.gmra.mxu0 %v145
    %v166 = vpop.f32.mrf.mxu0
    %v167 = vadd.f32 0.0, %v166
    %168 = vdwg.mxu0
    %v169 = vmul.f32 %v167, 0.35355338
    %v170 = vperm.slane %v31, 0
    %v171 = vadd.f32 %v169, %v170
    %v172 = vsel %vm144, %v171, -inf
    %173 = vmax.xlane.f32.xlu0 %v172
    %v174 = vpop.xlane.xlu0 %173
    %v175 = vsub.f32 %v171, %v174
    %v176 = vmul.f32 %v175, 1.442695
    %v177 = vpow.pop %v176
    %v178 = vsel %vm144, %v177, 0.0
    %179 = vadd.xlane.f32.xlu0 %v178
    %v180 = vpop.xlane.xlu0 %179
    %v181 = vrcp.pop %v180
    %v182 = vmul.f32 %v177, %v181
    %183 = vrot.lane.b32.xlu0 %v139, 64
    %v184 = vpop.permute.xlu0 %183
    %v187 = vsel %vm144, %v182, 0
    %189 = vmatpush.msra.mxu0 0.0
    %190 = vmatpush.msra.mxu0 0.0
    %191 = vmatpush.msra.mxu0 0.0
    %192 = vmatpush.msra.mxu0 0.0
    %193 = vmatpush.msra.mxu0 0.0
    %194 = vmatpush.msra.mxu0 0.0
    %195 = vmatpush.msra.mxu0 0.0
    %196 = vmatpush.msra.mxu0 0.0
    %197 = vmatpush.msra.mxu0 0.0
    %198 = vmatpush.msra.mxu0 0.0
    %199 = vmatpush.msra.mxu0 0.0
    %200 = vmatpush.msra.mxu0 0.0
    %201 = vmatpush.msra.mxu0 0.0
    %202 = vmatpush.msra.mxu0 0.0
    %203 = vmatpush.msra.mxu0 0.0
    %204 = vmatpush.msra.mxu0 %v184
    %205 = vmatmul.f32.gmra.mxu0 %v187
    %v206 = vpop.f32.mrf.mxu0
    %v207 = vadd.f32 0.0, %v206
    %208 = vdwg.mxu0
    %v209 = vld [vmem:[%s5] sm:$0xff]
    %210 = vrot.lane.b32.xlu0 %v139, 120
    %v211 = vpop.permute.xlu0 %210
    %212 = vrot.lane.b32.xlu0 %v139, 88
    %v213 = vpop.permute.xlu0 %212
    %v214 = vsel %vm144, %v211, 0
    %v216 = vsel %vm144, %v213, 0
    %218 = vmatpush.xpose.msra.mxu0 0.0
    %219 = vmatpush.xpose.msra.mxu0 0.0
    %220 = vmatpush.xpose.msra.mxu0 0.0
    %221 = vmatpush.xpose.msra.mxu0 0.0
    %222 = vmatpush.xpose.msra.mxu0 0.0
    %223 = vmatpush.xpose.msra.mxu0 0.0
    %224 = vmatpush.xpose.msra.mxu0 0.0
    %225 = vmatpush.xpose.msra.mxu0 0.0
    %226 = vmatpush.xpose.msra.mxu0 0.0
    %227 = vmatpush.xpose.msra.mxu0 0.0
    %228 = vmatpush.xpose.msra.mxu0 0.0
    %229 = vmatpush.xpose.msra.mxu0 0.0
    %230 = vmatpush.xpose.msra.mxu0 0.0
    %231 = vmatpush.xpose.msra.mxu0 0.0
    %232 = vmatpush.xpose.msra.mxu0 0.0
    %233 = vmatpush.xpose.msra.mxu0 %v216
    %234 = vmatmul.f32.gmra.mxu0 %v214
    %v235 = vpop.f32.mrf.mxu0
    %v236 = vadd.f32 0.0, %v235
    %237 = vdwg.mxu0
    %v238 = vmul.f32 %v236, 0.35355338
    %v239 = vadd.f32 %v238, %v170
    %v240 = vsel %vm144, %v239, -inf
    %241 = vmax.xlane.f32.xlu0 %v240
    %v242 = vpop.xlane.xlu0 %241
    %v243 = vsub.f32 %v239, %v242
    %v244 = vmul.f32 %v243, 1.442695
    %v245 = vpow.pop %v244
    %v246 = vsel %vm144, %v245, 0.0
    %247 = vadd.xlane.f32.xlu0 %v246
    %v248 = vpop.xlane.xlu0 %247
    %v249 = vrcp.pop %v248
    %v250 = vmul.f32 %v245, %v249
    %251 = vrot.lane.b32.xlu0 %v139, 56
    %v252 = vpop.permute.xlu0 %251
    %v255 = vsel %vm144, %v250, 0
    %257 = vmatpush.msra.mxu0 0.0
    %258 = vmatpush.msra.mxu0 0.0
    %259 = vmatpush.msra.mxu0 0.0
    %260 = vmatpush.msra.mxu0 0.0
    %261 = vmatpush.msra.mxu0 0.0
    %262 = vmatpush.msra.mxu0 0.0
    %263 = vmatpush.msra.mxu0 0.0
    %264 = vmatpush.msra.mxu0 0.0
    %265 = vmatpush.msra.mxu0 0.0
    %266 = vmatpush.msra.mxu0 0.0
    %267 = vmatpush.msra.mxu0 0.0
    %268 = vmatpush.msra.mxu0 0.0
    %269 = vmatpush.msra.mxu0 0.0
    %270 = vmatpush.msra.mxu0 0.0
    %271 = vmatpush.msra.mxu0 0.0
    %272 = vmatpush.msra.mxu0 %v252
    %273 = vmatmul.f32.gmra.mxu0 %v255
    %v274 = vpop.f32.mrf.mxu0
    %v275 = vadd.f32 0.0, %v274
    %276 = vdwg.mxu0
    %s277 = scalar_lea.vmem %s5, 8
    %v278 = vld [vmem:[%s277] sm:$0xff]
    %v280 = vsel %vm144, %v275, 0
    %282 = vmatpush.msra.mxu0 0.0
    %283 = vmatpush.msra.mxu0 0.0
    %284 = vmatpush.msra.mxu0 0.0
    %285 = vmatpush.msra.mxu0 0.0
    %286 = vmatpush.msra.mxu0 0.0
    %287 = vmatpush.msra.mxu0 0.0
    %288 = vmatpush.msra.mxu0 0.0
    %289 = vmatpush.msra.mxu0 0.0
    %290 = vmatpush.msra.mxu0 0.0
    %291 = vmatpush.msra.mxu0 0.0
    %292 = vmatpush.msra.mxu0 0.0
    %293 = vmatpush.msra.mxu0 0.0
    %294 = vmatpush.msra.mxu0 0.0
    %295 = vmatpush.msra.mxu0 0.0
    %296 = vmatpush.msra.mxu0 0.0
    %297 = vmatpush.msra.mxu0 %v278
    %298 = vmatmul.f32.gmra.mxu0 %v280
    %v299 = vpop.f32.mrf.mxu0
    %v300 = vadd.f32 0.0, %v299
    %301 = vdwg.mxu0
    %v303 = vsel %vm144, %v207, 0
    %305 = vmatpush.msra.mxu0 0.0
    %306 = vmatpush.msra.mxu0 0.0
    %307 = vmatpush.msra.mxu0 0.0
    %308 = vmatpush.msra.mxu0 0.0
    %309 = vmatpush.msra.mxu0 0.0
    %310 = vmatpush.msra.mxu0 0.0
    %311 = vmatpush.msra.mxu0 0.0
    %312 = vmatpush.msra.mxu0 0.0
    %313 = vmatpush.msra.mxu0 0.0
    %314 = vmatpush.msra.mxu0 0.0
    %315 = vmatpush.msra.mxu0 0.0
    %316 = vmatpush.msra.mxu0 0.0
    %317 = vmatpush.msra.mxu0 0.0
    %318 = vmatpush.msra.mxu0 0.0
    %319 = vmatpush.msra.mxu0 0.0
    %320 = vmatpush.msra.mxu0 %v209
    %321 = vmatmul.f32.gmra.mxu0 %v303
    %v322 = vpop.f32.mrf.mxu0
    %v323 = vadd.f32 %v300, %v322
    %324 = vdwg.mxu0
    %325 = vrot.lane.b32.xlu0 %v139, 112
    %v326 = vpop.permute.xlu0 %325
    %327 = vrot.lane.b32.xlu0 %v139, 80
    %v328 = vpop.permute.xlu0 %327
    %v329 = vsel %vm144, %v326, 0
    %v331 = vsel %vm144, %v328, 0
    %333 = vmatpush.xpose.msra.mxu0 0.0
    %334 = vmatpush.xpose.msra.mxu0 0.0
    %335 = vmatpush.xpose.msra.mxu0 0.0
    %336 = vmatpush.xpose.msra.mxu0 0.0
    %337 = vmatpush.xpose.msra.mxu0 0.0
    %338 = vmatpush.xpose.msra.mxu0 0.0
    %339 = vmatpush.xpose.msra.mxu0 0.0
    %340 = vmatpush.xpose.msra.mxu0 0.0
    %341 = vmatpush.xpose.msra.mxu0 0.0
    %342 = vmatpush.xpose.msra.mxu0 0.0
    %343 = vmatpush.xpose.msra.mxu0 0.0
    %344 = vmatpush.xpose.msra.mxu0 0.0
    %345 = vmatpush.xpose.msra.mxu0 0.0
    %346 = vmatpush.xpose.msra.mxu0 0.0
    %347 = vmatpush.xpose.msra.mxu0 0.0
    %348 = vmatpush.xpose.msra.mxu0 %v331
    %349 = vmatmul.f32.gmra.mxu0 %v329
    %v350 = vpop.f32.mrf.mxu0
    %v351 = vadd.f32 0.0, %v350
    %352 = vdwg.mxu0
    %v353 = vmul.f32 %v351, 0.35355338
    %v354 = vadd.f32 %v353, %v170
    %v355 = vsel %vm144, %v354, -inf
    %356 = vmax.xlane.f32.xlu0 %v355
    %v357 = vpop.xlane.xlu0 %356
    %v358 = vsub.f32 %v354, %v357
    %v359 = vmul.f32 %v358, 1.442695
    %v360 = vpow.pop %v359
    %v361 = vsel %vm144, %v360, 0.0
    %362 = vadd.xlane.f32.xlu0 %v361
    %v363 = vpop.xlane.xlu0 %362
    %v364 = vrcp.pop %v363
    %v365 = vmul.f32 %v360, %v364
    %366 = vrot.lane.b32.xlu0 %v139, 48
    %v367 = vpop.permute.xlu0 %366
    %v370 = vsel %vm144, %v365, 0
    %372 = vmatpush.msra.mxu0 0.0
    %373 = vmatpush.msra.mxu0 0.0
    %374 = vmatpush.msra.mxu0 0.0
    %375 = vmatpush.msra.mxu0 0.0
    %376 = vmatpush.msra.mxu0 0.0
    %377 = vmatpush.msra.mxu0 0.0
    %378 = vmatpush.msra.mxu0 0.0
    %379 = vmatpush.msra.mxu0 0.0
    %380 = vmatpush.msra.mxu0 0.0
    %381 = vmatpush.msra.mxu0 0.0
    %382 = vmatpush.msra.mxu0 0.0
    %383 = vmatpush.msra.mxu0 0.0
    %384 = vmatpush.msra.mxu0 0.0
    %385 = vmatpush.msra.mxu0 0.0
    %386 = vmatpush.msra.mxu0 0.0
    %387 = vmatpush.msra.mxu0 %v367
    %388 = vmatmul.f32.gmra.mxu0 %v370
    %v389 = vpop.f32.mrf.mxu0
    %v390 = vadd.f32 0.0, %v389
    %391 = vdwg.mxu0
    %s392 = scalar_lea.vmem %s5, 16
    %v393 = vld [vmem:[%s392] sm:$0xff]
    %v395 = vsel %vm144, %v390, 0
    %397 = vmatpush.msra.mxu0 0.0
    %398 = vmatpush.msra.mxu0 0.0
    %399 = vmatpush.msra.mxu0 0.0
    %400 = vmatpush.msra.mxu0 0.0
    %401 = vmatpush.msra.mxu0 0.0
    %402 = vmatpush.msra.mxu0 0.0
    %403 = vmatpush.msra.mxu0 0.0
    %404 = vmatpush.msra.mxu0 0.0
    %405 = vmatpush.msra.mxu0 0.0
    %406 = vmatpush.msra.mxu0 0.0
    %407 = vmatpush.msra.mxu0 0.0
    %408 = vmatpush.msra.mxu0 0.0
    %409 = vmatpush.msra.mxu0 0.0
    %410 = vmatpush.msra.mxu0 0.0
    %411 = vmatpush.msra.mxu0 0.0
    %412 = vmatpush.msra.mxu0 %v393
    %413 = vmatmul.f32.gmra.mxu0 %v395
    %v414 = vpop.f32.mrf.mxu0
    %v415 = vadd.f32 0.0, %v414
    %416 = vdwg.mxu0
    %v417 = vadd.f32 %v323, %v415
    %418 = vrot.lane.b32.xlu0 %v139, 104
    %v419 = vpop.permute.xlu0 %418
    %420 = vrot.lane.b32.xlu0 %v139, 72
    %v421 = vpop.permute.xlu0 %420
    %v422 = vsel %vm144, %v419, 0
    %v424 = vsel %vm144, %v421, 0
    %426 = vmatpush.xpose.msra.mxu0 0.0
    %427 = vmatpush.xpose.msra.mxu0 0.0
    %428 = vmatpush.xpose.msra.mxu0 0.0
    %429 = vmatpush.xpose.msra.mxu0 0.0
    %430 = vmatpush.xpose.msra.mxu0 0.0
    %431 = vmatpush.xpose.msra.mxu0 0.0
    %432 = vmatpush.xpose.msra.mxu0 0.0
    %433 = vmatpush.xpose.msra.mxu0 0.0
    %434 = vmatpush.xpose.msra.mxu0 0.0
    %435 = vmatpush.xpose.msra.mxu0 0.0
    %436 = vmatpush.xpose.msra.mxu0 0.0
    %437 = vmatpush.xpose.msra.mxu0 0.0
    %438 = vmatpush.xpose.msra.mxu0 0.0
    %439 = vmatpush.xpose.msra.mxu0 0.0
    %440 = vmatpush.xpose.msra.mxu0 0.0
    %441 = vmatpush.xpose.msra.mxu0 %v424
    %442 = vmatmul.f32.gmra.mxu0 %v422
    %v443 = vpop.f32.mrf.mxu0
    %v444 = vadd.f32 0.0, %v443
    %445 = vdwg.mxu0
    %v446 = vmul.f32 %v444, 0.35355338
    %v447 = vadd.f32 %v446, %v170
    %v448 = vsel %vm144, %v447, -inf
    %449 = vmax.xlane.f32.xlu0 %v448
    %v450 = vpop.xlane.xlu0 %449
    %v451 = vsub.f32 %v447, %v450
    %v452 = vmul.f32 %v451, 1.442695
    %v453 = vpow.pop %v452
    %v454 = vsel %vm144, %v453, 0.0
    %455 = vadd.xlane.f32.xlu0 %v454
    %v456 = vpop.xlane.xlu0 %455
    %v457 = vrcp.pop %v456
    %v458 = vmul.f32 %v453, %v457
    %459 = vrot.lane.b32.xlu0 %v139, 40
    %v460 = vpop.permute.xlu0 %459
    %v463 = vsel %vm144, %v458, 0
    %465 = vmatpush.msra.mxu0 0.0
    %466 = vmatpush.msra.mxu0 0.0
    %467 = vmatpush.msra.mxu0 0.0
    %468 = vmatpush.msra.mxu0 0.0
    %469 = vmatpush.msra.mxu0 0.0
    %470 = vmatpush.msra.mxu0 0.0
    %471 = vmatpush.msra.mxu0 0.0
    %472 = vmatpush.msra.mxu0 0.0
    %473 = vmatpush.msra.mxu0 0.0
    %474 = vmatpush.msra.mxu0 0.0
    %475 = vmatpush.msra.mxu0 0.0
    %476 = vmatpush.msra.mxu0 0.0
    %477 = vmatpush.msra.mxu0 0.0
    %478 = vmatpush.msra.mxu0 0.0
    %479 = vmatpush.msra.mxu0 0.0
    %480 = vmatpush.msra.mxu0 %v460
    %481 = vmatmul.f32.gmra.mxu0 %v463
    %v482 = vpop.f32.mrf.mxu0
    %v483 = vadd.f32 0.0, %v482
    %484 = vdwg.mxu0
    %s485 = scalar_lea.vmem %s5, 24
    %v486 = vld [vmem:[%s485] sm:$0xff]
    %v488 = vsel %vm144, %v483, 0
    %490 = vmatpush.msra.mxu0 0.0
    %491 = vmatpush.msra.mxu0 0.0
    %492 = vmatpush.msra.mxu0 0.0
    %493 = vmatpush.msra.mxu0 0.0
    %494 = vmatpush.msra.mxu0 0.0
    %495 = vmatpush.msra.mxu0 0.0
    %496 = vmatpush.msra.mxu0 0.0
    %497 = vmatpush.msra.mxu0 0.0
    %498 = vmatpush.msra.mxu0 0.0
    %499 = vmatpush.msra.mxu0 0.0
    %500 = vmatpush.msra.mxu0 0.0
    %501 = vmatpush.msra.mxu0 0.0
    %502 = vmatpush.msra.mxu0 0.0
    %503 = vmatpush.msra.mxu0 0.0
    %504 = vmatpush.msra.mxu0 0.0
    %505 = vmatpush.msra.mxu0 %v486
    %506 = vmatmul.f32.gmra.mxu0 %v488
    %v507 = vpop.f32.mrf.mxu0
    %v508 = vadd.f32 0.0, %v507
    %509 = vdwg.mxu0
    %v510 = vadd.f32 %v417, %v508
    %v511 = vperm.slane %v31, 5
    %v512 = vadd.f32 %v510, %v511
    %v513 = vadd.f32 %v112, %v512
    %v514 = vsel %vm79, %v513, 0.0
    %515 = vadd.xlane.f32.xlu0 %v514
    %v516 = vpop.xlane.xlu0 %515
    %v517 = vmul.f32 %v516, %v89
    %v518 = vsub.f32 %v513, %v517
    %v519 = vmul.f32 %v518, %v518
    %v520 = vsel %vm79, %v519, 0.0
    %521 = vadd.xlane.f32.xlu0 %v520
    %v522 = vpop.xlane.xlu0 %521
    %v523 = vmul.f32 %v522, %v89
    %v524 = vadd.f32 %v523, 1e-05
    %v525 = vrsqrt.pop %v524
    %v526 = vmul.f32 %v525, %v524
    %v527 = vmul.f32 %v526, %v525
    %v528 = vmul.f32 0.5, %v527
    %v529 = vsub.f32 1.5, %v528
    %v530 = vmul.f32 %v525, %v529
    %vm531 = vweird.f32 %v524
    %vm532 = vweird.f32 %v525
    %vm533 = vmor %vm531, %vm532
    %v534 = vsel %vm533, %v525, %v530
    %v535 = vmul.f32 %v518, %v534
    %v536 = vperm.slane %v32, 0
    %v537 = vmul.f32 %v535, %v536
    %v538 = vperm.slane %v32, 1
    %v539 = vadd.f32 %v537, %v538
    %v540 = vld [vmem:[%s6] sm:$0xff]
    %v541 = vld [vmem:[%s6 + $0x8] sm:$0xff]
    %v542 = vld [vmem:[%s6 + $0x10] sm:$0xff]
    %v543 = vld [vmem:[%s6 + $0x18] sm:$0xff]
    %v544 = vperm.slane %v31, 6
    %v546 = vsel %vm79, %v539, 0
    %548 = vmatpush.msra.mxu0 0.0
    %549 = vmatpush.msra.mxu0 0.0
    %550 = vmatpush.msra.mxu0 0.0
    %551 = vmatpush.msra.mxu0 0.0
    %552 = vmatpush.msra.mxu0 0.0
    %553 = vmatpush.msra.mxu0 0.0
    %554 = vmatpush.msra.mxu0 0.0
    %555 = vmatpush.msra.mxu0 0.0
    %556 = vmatpush.msra.mxu0 0.0
    %557 = vmatpush.msra.mxu0 0.0
    %558 = vmatpush.msra.mxu0 0.0
    %559 = vmatpush.msra.mxu0 0.0
    %560 = vmatpush.msra.mxu0 %v543
    %561 = vmatpush.msra.mxu0 %v542
    %562 = vmatpush.msra.mxu0 %v541
    %563 = vmatpush.msra.mxu0 %v540
    %564 = vmatmul.f32.gmra.mxu0 %v546
    %v565 = vpop.f32.mrf.mxu0
    %v566 = vadd.f32 %v544, %v565
    %567 = vdwg.mxu0
    %v568 = vmul.f32 %v566, %v566
    %v569 = vmul.f32 %v566, %v568
    %v570 = vmul.f32 %v569, 0.044715
    %v571 = vadd.f32 %v566, %v570
    %v572 = vmul.f32 %v571, 0.7978846
    %v573 = vtanh.pop %v572
    %v574 = vadd.f32 %v573, 1.0
    %v575 = vmul.f32 %v574, 0.5
    %v576 = vmul.f32 %v566, %v575
    %v577 = vld [vmem:[%s7] sm:$0xff]
    %v578 = vld [vmem:[%s7 + $0x8] sm:$0xff]
    %v579 = vld [vmem:[%s7 + $0x10] sm:$0xff]
    %v580 = vld [vmem:[%s7 + $0x18] sm:$0xff]
    %v581 = vld [vmem:[%s7 + $0x20] sm:$0xff]
    %v582 = vld [vmem:[%s7 + $0x28] sm:$0xff]
    %v583 = vld [vmem:[%s7 + $0x30] sm:$0xff]
    %v584 = vld [vmem:[%s7 + $0x38] sm:$0xff]
    %v585 = vperm.slane %v31, 7
    %vm586 = vcmask 523264
    %v588 = vsel %vm586, %v576, 0
    %590 = vmatpush.msra.mxu0 0.0
    %591 = vmatpush.msra.mxu0 0.0
    %592 = vmatpush.msra.mxu0 0.0
    %593 = vmatpush.msra.mxu0 0.0
    %594 = vmatpush.msra.mxu0 0.0
    %595 = vmatpush.msra.mxu0 0.0
    %596 = vmatpush.msra.mxu0 0.0
    %597 = vmatpush.msra.mxu0 0.0
    %598 = vmatpush.msra.mxu0 %v584
    %599 = vmatpush.msra.mxu0 %v583
    %600 = vmatpush.msra.mxu0 %v582
    %601 = vmatpush.msra.mxu0 %v581
    %602 = vmatpush.msra.mxu0 %v580
    %603 = vmatpush.msra.mxu0 %v579
    %604 = vmatpush.msra.mxu0 %v578
    %605 = vmatpush.msra.mxu0 %v577
    %606 = vmatmul.f32.gmra.mxu0 %v588
    %v607 = vpop.f32.mrf.mxu0
    %v608 = vadd.f32 %v585, %v607
    %609 = vdwg.mxu0
    %v610 = vadd.f32 %v539, %v608
    %v611 = vsel %vm79, %v610, 0.0
    %612 = vadd.xlane.f32.xlu0 %v611
    %v613 = vpop.xlane.xlu0 %612
    %v614 = vmul.f32 %v613, %v89
    %v615 = vsub.f32 %v610, %v614
    %v616 = vmul.f32 %v615, %v615
    %v617 = vsel %vm79, %v616, 0.0
    %618 = vadd.xlane.f32.xlu0 %v617
    %v619 = vpop.xlane.xlu0 %618
    %v620 = vmul.f32 %v619, %v89
    %v621 = vadd.f32 %v620, 1e-05
    %v622 = vrsqrt.pop %v621
    %v623 = vmul.f32 %v622, %v621
    %v624 = vmul.f32 %v623, %v622
    %v625 = vmul.f32 0.5, %v624
    %v626 = vsub.f32 1.5, %v625
    %v627 = vmul.f32 %v622, %v626
    %vm628 = vweird.f32 %v621
    %vm629 = vweird.f32 %v622
    %vm630 = vmor %vm628, %vm629
    %v631 = vsel %vm630, %v622, %v627
    %v632 = vmul.f32 %v615, %v631
    %v633 = vperm.slane %v32, 2
    %v634 = vmul.f32 %v632, %v633
    %v635 = vperm.slane %v32, 3
    %v636 = vadd.f32 %v634, %v635
    %s637 = scalar_lea.vmem %s4, 32
    %v638 = vld [vmem:[%s637] sm:$0xff]
    %v639 = vld [vmem:[%s637 + $0x8] sm:$0xff]
    %v640 = vld [vmem:[%s637 + $0x10] sm:$0xff]
    %v641 = vld [vmem:[%s637 + $0x18] sm:$0xff]
    %v642 = vperm.slane %v32, 4
    %v644 = vsel %vm79, %v636, 0
    %646 = vmatpush.msra.mxu0 0.0
    %647 = vmatpush.msra.mxu0 0.0
    %648 = vmatpush.msra.mxu0 0.0
    %649 = vmatpush.msra.mxu0 0.0
    %650 = vmatpush.msra.mxu0 0.0
    %651 = vmatpush.msra.mxu0 0.0
    %652 = vmatpush.msra.mxu0 0.0
    %653 = vmatpush.msra.mxu0 0.0
    %654 = vmatpush.msra.mxu0 0.0
    %655 = vmatpush.msra.mxu0 0.0
    %656 = vmatpush.msra.mxu0 0.0
    %657 = vmatpush.msra.mxu0 0.0
    %658 = vmatpush.msra.mxu0 %v641
    %659 = vmatpush.msra.mxu0 %v640
    %660 = vmatpush.msra.mxu0 %v639
    %661 = vmatpush.msra.mxu0 %v638
    %662 = vmatmul.f32.gmra.mxu0 %v644
    %v663 = vpop.f32.mrf.mxu0
    %v664 = vadd.f32 %v642, %v663
    %665 = vdwg.mxu0
    %667 = vrot.lane.b32.xlu0 %v664, 96
    %v668 = vpop.permute.xlu0 %667
    %v669 = vsel %vm144, %v664, 0
    %v671 = vsel %vm144, %v668, 0
    %673 = vmatpush.xpose.msra.mxu0 0.0
    %674 = vmatpush.xpose.msra.mxu0 0.0
    %675 = vmatpush.xpose.msra.mxu0 0.0
    %676 = vmatpush.xpose.msra.mxu0 0.0
    %677 = vmatpush.xpose.msra.mxu0 0.0
    %678 = vmatpush.xpose.msra.mxu0 0.0
    %679 = vmatpush.xpose.msra.mxu0 0.0
    %680 = vmatpush.xpose.msra.mxu0 0.0
    %681 = vmatpush.xpose.msra.mxu0 0.0
    %682 = vmatpush.xpose.msra.mxu0 0.0
    %683 = vmatpush.xpose.msra.mxu0 0.0
    %684 = vmatpush.xpose.msra.mxu0 0.0
    %685 = vmatpush.xpose.msra.mxu0 0.0
    %686 = vmatpush.xpose.msra.mxu0 0.0
    %687 = vmatpush.xpose.msra.mxu0 0.0
    %688 = vmatpush.xpose.msra.mxu0 %v671
    %689 = vmatmul.f32.gmra.mxu0 %v669
    %v690 = vpop.f32.mrf.mxu0
    %v691 = vadd.f32 0.0, %v690
    %692 = vdwg.mxu0
    %v693 = vmul.f32 %v691, 0.35355338
    %v694 = vadd.f32 %v693, %v170
    %v695 = vsel %vm144, %v694, -inf
    %696 = vmax.xlane.f32.xlu0 %v695
    %v697 = vpop.xlane.xlu0 %696
    %v698 = vsub.f32 %v694, %v697
    %v699 = vmul.f32 %v698, 1.442695
    %v700 = vpow.pop %v699
    %v701 = vsel %vm144, %v700, 0.0
    %702 = vadd.xlane.f32.xlu0 %v701
    %v703 = vpop.xlane.xlu0 %702
    %v704 = vrcp.pop %v703
    %v705 = vmul.f32 %v700, %v704
    %706 = vrot.lane.b32.xlu0 %v664, 64
    %v707 = vpop.permute.xlu0 %706
    %v710 = vsel %vm144, %v705, 0
    %712 = vmatpush.msra.mxu0 0.0
    %713 = vmatpush.msra.mxu0 0.0
    %714 = vmatpush.msra.mxu0 0.0
    %715 = vmatpush.msra.mxu0 0.0
    %716 = vmatpush.msra.mxu0 0.0
    %717 = vmatpush.msra.mxu0 0.0
    %718 = vmatpush.msra.mxu0 0.0
    %719 = vmatpush.msra.mxu0 0.0
    %720 = vmatpush.msra.mxu0 0.0
    %721 = vmatpush.msra.mxu0 0.0
    %722 = vmatpush.msra.mxu0 0.0
    %723 = vmatpush.msra.mxu0 0.0
    %724 = vmatpush.msra.mxu0 0.0
    %725 = vmatpush.msra.mxu0 0.0
    %726 = vmatpush.msra.mxu0 0.0
    %727 = vmatpush.msra.mxu0 %v707
    %728 = vmatmul.f32.gmra.mxu0 %v710
    %v729 = vpop.f32.mrf.mxu0
    %v730 = vadd.f32 0.0, %v729
    %731 = vdwg.mxu0
    %s732 = scalar_lea.vmem %s5, 32
    %v733 = vld [vmem:[%s732] sm:$0xff]
    %734 = vrot.lane.b32.xlu0 %v664, 120
    %v735 = vpop.permute.xlu0 %734
    %736 = vrot.lane.b32.xlu0 %v664, 88
    %v737 = vpop.permute.xlu0 %736
    %v738 = vsel %vm144, %v735, 0
    %v740 = vsel %vm144, %v737, 0
    %742 = vmatpush.xpose.msra.mxu0 0.0
    %743 = vmatpush.xpose.msra.mxu0 0.0
    %744 = vmatpush.xpose.msra.mxu0 0.0
    %745 = vmatpush.xpose.msra.mxu0 0.0
    %746 = vmatpush.xpose.msra.mxu0 0.0
    %747 = vmatpush.xpose.msra.mxu0 0.0
    %748 = vmatpush.xpose.msra.mxu0 0.0
    %749 = vmatpush.xpose.msra.mxu0 0.0
    %750 = vmatpush.xpose.msra.mxu0 0.0
    %751 = vmatpush.xpose.msra.mxu0 0.0
    %752 = vmatpush.xpose.msra.mxu0 0.0
    %753 = vmatpush.xpose.msra.mxu0 0.0
    %754 = vmatpush.xpose.msra.mxu0 0.0
    %755 = vmatpush.xpose.msra.mxu0 0.0
    %756 = vmatpush.xpose.msra.mxu0 0.0
    %757 = vmatpush.xpose.msra.mxu0 %v740
    %758 = vmatmul.f32.gmra.mxu0 %v738
    %v759 = vpop.f32.mrf.mxu0
    %v760 = vadd.f32 0.0, %v759
    %761 = vdwg.mxu0
    %v762 = vmul.f32 %v760, 0.35355338
    %v763 = vadd.f32 %v762, %v170
    %v764 = vsel %vm144, %v763, -inf
    %765 = vmax.xlane.f32.xlu0 %v764
    %v766 = vpop.xlane.xlu0 %765
    %v767 = vsub.f32 %v763, %v766
    %v768 = vmul.f32 %v767, 1.442695
    %v769 = vpow.pop %v768
    %v770 = vsel %vm144, %v769, 0.0
    %771 = vadd.xlane.f32.xlu0 %v770
    %v772 = vpop.xlane.xlu0 %771
    %v773 = vrcp.pop %v772
    %v774 = vmul.f32 %v769, %v773
    %775 = vrot.lane.b32.xlu0 %v664, 56
    %v776 = vpop.permute.xlu0 %775
    %v779 = vsel %vm144, %v774, 0
    %781 = vmatpush.msra.mxu0 0.0
    %782 = vmatpush.msra.mxu0 0.0
    %783 = vmatpush.msra.mxu0 0.0
    %784 = vmatpush.msra.mxu0 0.0
    %785 = vmatpush.msra.mxu0 0.0
    %786 = vmatpush.msra.mxu0 0.0
    %787 = vmatpush.msra.mxu0 0.0
    %788 = vmatpush.msra.mxu0 0.0
    %789 = vmatpush.msra.mxu0 0.0
    %790 = vmatpush.msra.mxu0 0.0
    %791 = vmatpush.msra.mxu0 0.0
    %792 = vmatpush.msra.mxu0 0.0
    %793 = vmatpush.msra.mxu0 0.0
    %794 = vmatpush.msra.mxu0 0.0
    %795 = vmatpush.msra.mxu0 0.0
    %796 = vmatpush.msra.mxu0 %v776
    %797 = vmatmul.f32.gmra.mxu0 %v779
    %v798 = vpop.f32.mrf.mxu0
    %v799 = vadd.f32 0.0, %v798
    %800 = vdwg.mxu0
    %s801 = scalar_lea.vmem %s5, 40
    %v802 = vld [vmem:[%s801] sm:$0xff]
    %v804 = vsel %vm144, %v799, 0
    %806 = vmatpush.msra.mxu0 0.0
    %807 = vmatpush.msra.mxu0 0.0
    %808 = vmatpush.msra.mxu0 0.0
    %809 = vmatpush.msra.mxu0 0.0
    %810 = vmatpush.msra.mxu0 0.0
    %811 = vmatpush.msra.mxu0 0.0
    %812 = vmatpush.msra.mxu0 0.0
    %813 = vmatpush.msra.mxu0 0.0
    %814 = vmatpush.msra.mxu0 0.0
    %815 = vmatpush.msra.mxu0 0.0
    %816 = vmatpush.msra.mxu0 0.0
    %817 = vmatpush.msra.mxu0 0.0
    %818 = vmatpush.msra.mxu0 0.0
    %819 = vmatpush.msra.mxu0 0.0
    %820 = vmatpush.msra.mxu0 0.0
    %821 = vmatpush.msra.mxu0 %v802
    %822 = vmatmul.f32.gmra.mxu0 %v804
    %v823 = vpop.f32.mrf.mxu0
    %v824 = vadd.f32 0.0, %v823
    %825 = vdwg.mxu0
    %v827 = vsel %vm144, %v730, 0
    %829 = vmatpush.msra.mxu0 0.0
    %830 = vmatpush.msra.mxu0 0.0
    %831 = vmatpush.msra.mxu0 0.0
    %832 = vmatpush.msra.mxu0 0.0
    %833 = vmatpush.msra.mxu0 0.0
    %834 = vmatpush.msra.mxu0 0.0
    %835 = vmatpush.msra.mxu0 0.0
    %836 = vmatpush.msra.mxu0 0.0
    %837 = vmatpush.msra.mxu0 0.0
    %838 = vmatpush.msra.mxu0 0.0
    %839 = vmatpush.msra.mxu0 0.0
    %840 = vmatpush.msra.mxu0 0.0
    %841 = vmatpush.msra.mxu0 0.0
    %842 = vmatpush.msra.mxu0 0.0
    %843 = vmatpush.msra.mxu0 0.0
    %844 = vmatpush.msra.mxu0 %v733
    %845 = vmatmul.f32.gmra.mxu0 %v827
    %v846 = vpop.f32.mrf.mxu0
    %v847 = vadd.f32 %v824, %v846
    %848 = vdwg.mxu0
    %849 = vrot.lane.b32.xlu0 %v664, 112
    %v850 = vpop.permute.xlu0 %849
    %851 = vrot.lane.b32.xlu0 %v664, 80
    %v852 = vpop.permute.xlu0 %851
    %v853 = vsel %vm144, %v850, 0
    %v855 = vsel %vm144, %v852, 0
    %857 = vmatpush.xpose.msra.mxu0 0.0
    %858 = vmatpush.xpose.msra.mxu0 0.0
    %859 = vmatpush.xpose.msra.mxu0 0.0
    %860 = vmatpush.xpose.msra.mxu0 0.0
    %861 = vmatpush.xpose.msra.mxu0 0.0
    %862 = vmatpush.xpose.msra.mxu0 0.0
    %863 = vmatpush.xpose.msra.mxu0 0.0
    %864 = vmatpush.xpose.msra.mxu0 0.0
    %865 = vmatpush.xpose.msra.mxu0 0.0
    %866 = vmatpush.xpose.msra.mxu0 0.0
    %867 = vmatpush.xpose.msra.mxu0 0.0
    %868 = vmatpush.xpose.msra.mxu0 0.0
    %869 = vmatpush.xpose.msra.mxu0 0.0
    %870 = vmatpush.xpose.msra.mxu0 0.0
    %871 = vmatpush.xpose.msra.mxu0 0.0
    %872 = vmatpush.xpose.msra.mxu0 %v855
    %873 = vmatmul.f32.gmra.mxu0 %v853
    %v874 = vpop.f32.mrf.mxu0
    %v875 = vadd.f32 0.0, %v874
    %876 = vdwg.mxu0
    %v877 = vmul.f32 %v875, 0.35355338
    %v878 = vadd.f32 %v877, %v170
    %v879 = vsel %vm144, %v878, -inf
    %880 = vmax.xlane.f32.xlu0 %v879
    %v881 = vpop.xlane.xlu0 %880
    %v882 = vsub.f32 %v878, %v881
    %v883 = vmul.f32 %v882, 1.442695
    %v884 = vpow.pop %v883
    %v885 = vsel %vm144, %v884, 0.0
    %886 = vadd.xlane.f32.xlu0 %v885
    %v887 = vpop.xlane.xlu0 %886
    %v888 = vrcp.pop %v887
    %v889 = vmul.f32 %v884, %v888
    %890 = vrot.lane.b32.xlu0 %v664, 48
    %v891 = vpop.permute.xlu0 %890
    %v894 = vsel %vm144, %v889, 0
    %896 = vmatpush.msra.mxu0 0.0
    %897 = vmatpush.msra.mxu0 0.0
    %898 = vmatpush.msra.mxu0 0.0
    %899 = vmatpush.msra.mxu0 0.0
    %900 = vmatpush.msra.mxu0 0.0
    %901 = vmatpush.msra.mxu0 0.0
    %902 = vmatpush.msra.mxu0 0.0
    %903 = vmatpush.msra.mxu0 0.0
    %904 = vmatpush.msra.mxu0 0.0
    %905 = vmatpush.msra.mxu0 0.0
    %906 = vmatpush.msra.mxu0 0.0
    %907 = vmatpush.msra.mxu0 0.0
    %908 = vmatpush.msra.mxu0 0.0
    %909 = vmatpush.msra.mxu0 0.0
    %910 = vmatpush.msra.mxu0 0.0
    %911 = vmatpush.msra.mxu0 %v891
    %912 = vmatmul.f32.gmra.mxu0 %v894
    %v913 = vpop.f32.mrf.mxu0
    %v914 = vadd.f32 0.0, %v913
    %915 = vdwg.mxu0
    %s916 = scalar_lea.vmem %s5, 48
    %v917 = vld [vmem:[%s916] sm:$0xff]
    %v919 = vsel %vm144, %v914, 0
    %921 = vmatpush.msra.mxu0 0.0
    %922 = vmatpush.msra.mxu0 0.0
    %923 = vmatpush.msra.mxu0 0.0
    %924 = vmatpush.msra.mxu0 0.0
    %925 = vmatpush.msra.mxu0 0.0
    %926 = vmatpush.msra.mxu0 0.0
    %927 = vmatpush.msra.mxu0 0.0
    %928 = vmatpush.msra.mxu0 0.0
    %929 = vmatpush.msra.mxu0 0.0
    %930 = vmatpush.msra.mxu0 0.0
    %931 = vmatpush.msra.mxu0 0.0
    %932 = vmatpush.msra.mxu0 0.0
    %933 = vmatpush.msra.mxu0 0.0
    %934 = vmatpush.msra.mxu0 0.0
    %935 = vmatpush.msra.mxu0 0.0
    %936 = vmatpush.msra.mxu0 %v917
    %937 = vmatmul.f32.gmra.mxu0 %v919
    %v938 = vpop.f32.mrf.mxu0
    %v939 = vadd.f32 0.0, %v938
    %940 = vdwg.mxu0
    %v941 = vadd.f32 %v847, %v939
    %942 = vrot.lane.b32.xlu0 %v664, 104
    %v943 = vpop.permute.xlu0 %942
    %944 = vrot.lane.b32.xlu0 %v664, 72
    %v945 = vpop.permute.xlu0 %944
    %v946 = vsel %vm144, %v943, 0
    %v948 = vsel %vm144, %v945, 0
    %950 = vmatpush.xpose.msra.mxu0 0.0
    %951 = vmatpush.xpose.msra.mxu0 0.0
    %952 = vmatpush.xpose.msra.mxu0 0.0
    %953 = vmatpush.xpose.msra.mxu0 0.0
    %954 = vmatpush.xpose.msra.mxu0 0.0
    %955 = vmatpush.xpose.msra.mxu0 0.0
    %956 = vmatpush.xpose.msra.mxu0 0.0
    %957 = vmatpush.xpose.msra.mxu0 0.0
    %958 = vmatpush.xpose.msra.mxu0 0.0
    %959 = vmatpush.xpose.msra.mxu0 0.0
    %960 = vmatpush.xpose.msra.mxu0 0.0
    %961 = vmatpush.xpose.msra.mxu0 0.0
    %962 = vmatpush.xpose.msra.mxu0 0.0
    %963 = vmatpush.xpose.msra.mxu0 0.0
    %964 = vmatpush.xpose.msra.mxu0 0.0
    %965 = vmatpush.xpose.msra.mxu0 %v948
    %966 = vmatmul.f32.gmra.mxu0 %v946
    %v967 = vpop.f32.mrf.mxu0
    %v968 = vadd.f32 0.0, %v967
    %969 = vdwg.mxu0
    %v970 = vmul.f32 %v968, 0.35355338
    %v971 = vadd.f32 %v970, %v170
    %v972 = vsel %vm144, %v971, -inf
    %973 = vmax.xlane.f32.xlu0 %v972
    %v974 = vpop.xlane.xlu0 %973
    %v975 = vsub.f32 %v971, %v974
    %v976 = vmul.f32 %v975, 1.442695
    %v977 = vpow.pop %v976
    %v978 = vsel %vm144, %v977, 0.0
    %979 = vadd.xlane.f32.xlu0 %v978
    %v980 = vpop.xlane.xlu0 %979
    %v981 = vrcp.pop %v980
    %v982 = vmul.f32 %v977, %v981
    %983 = vrot.lane.b32.xlu0 %v664, 40
    %v984 = vpop.permute.xlu0 %983
    %v987 = vsel %vm144, %v982, 0
    %989 = vmatpush.msra.mxu0 0.0
    %990 = vmatpush.msra.mxu0 0.0
    %991 = vmatpush.msra.mxu0 0.0
    %992 = vmatpush.msra.mxu0 0.0
    %993 = vmatpush.msra.mxu0 0.0
    %994 = vmatpush.msra.mxu0 0.0
    %995 = vmatpush.msra.mxu0 0.0
    %996 = vmatpush.msra.mxu0 0.0
    %997 = vmatpush.msra.mxu0 0.0
    %998 = vmatpush.msra.mxu0 0.0
    %999 = vmatpush.msra.mxu0 0.0
    %1000 = vmatpush.msra.mxu0 0.0
    %1001 = vmatpush.msra.mxu0 0.0
    %1002 = vmatpush.msra.mxu0 0.0
    %1003 = vmatpush.msra.mxu0 0.0
    %1004 = vmatpush.msra.mxu0 %v984
    %1005 = vmatmul.f32.gmra.mxu0 %v987
    %v1006 = vpop.f32.mrf.mxu0
    %v1007 = vadd.f32 0.0, %v1006
    %1008 = vdwg.mxu0
    %s1009 = scalar_lea.vmem %s5, 56
    %v1010 = vld [vmem:[%s1009] sm:$0xff]
    %v1012 = vsel %vm144, %v1007, 0
    %1014 = vmatpush.msra.mxu0 0.0
    %1015 = vmatpush.msra.mxu0 0.0
    %1016 = vmatpush.msra.mxu0 0.0
    %1017 = vmatpush.msra.mxu0 0.0
    %1018 = vmatpush.msra.mxu0 0.0
    %1019 = vmatpush.msra.mxu0 0.0
    %1020 = vmatpush.msra.mxu0 0.0
    %1021 = vmatpush.msra.mxu0 0.0
    %1022 = vmatpush.msra.mxu0 0.0
    %1023 = vmatpush.msra.mxu0 0.0
    %1024 = vmatpush.msra.mxu0 0.0
    %1025 = vmatpush.msra.mxu0 0.0
    %1026 = vmatpush.msra.mxu0 0.0
    %1027 = vmatpush.msra.mxu0 0.0
    %1028 = vmatpush.msra.mxu0 0.0
    %1029 = vmatpush.msra.mxu0 %v1010
    %1030 = vmatmul.f32.gmra.mxu0 %v1012
    %v1031 = vpop.f32.mrf.mxu0
    %v1032 = vadd.f32 0.0, %v1031
    %1033 = vdwg.mxu0
    %v1034 = vadd.f32 %v941, %v1032
    %v1035 = vperm.slane %v32, 5
    %v1036 = vadd.f32 %v1034, %v1035
    %v1037 = vadd.f32 %v636, %v1036
    %v1038 = vsel %vm79, %v1037, 0.0
    %1039 = vadd.xlane.f32.xlu0 %v1038
    %v1040 = vpop.xlane.xlu0 %1039
    %v1041 = vmul.f32 %v1040, %v89
    %v1042 = vsub.f32 %v1037, %v1041
    %v1043 = vmul.f32 %v1042, %v1042
    %v1044 = vsel %vm79, %v1043, 0.0
    %1045 = vadd.xlane.f32.xlu0 %v1044
    %v1046 = vpop.xlane.xlu0 %1045
    %v1047 = vmul.f32 %v1046, %v89
    %v1048 = vadd.f32 %v1047, 1e-05
    %v1049 = vrsqrt.pop %v1048
    %v1050 = vmul.f32 %v1049, %v1048
    %v1051 = vmul.f32 %v1050, %v1049
    %v1052 = vmul.f32 0.5, %v1051
    %v1053 = vsub.f32 1.5, %v1052
    %v1054 = vmul.f32 %v1049, %v1053
    %vm1055 = vweird.f32 %v1048
    %vm1056 = vweird.f32 %v1049
    %vm1057 = vmor %vm1055, %vm1056
    %v1058 = vsel %vm1057, %v1049, %v1054
    %v1059 = vmul.f32 %v1042, %v1058
    %v1060 = vperm.slane %v33, 0
    %v1061 = vmul.f32 %v1059, %v1060
    %v1062 = vperm.slane %v33, 1
    %v1063 = vadd.f32 %v1061, %v1062
    %s1064 = scalar_lea.vmem %s6, 32
    %v1065 = vld [vmem:[%s1064] sm:$0xff]
    %v1066 = vld [vmem:[%s1064 + $0x8] sm:$0xff]
    %v1067 = vld [vmem:[%s1064 + $0x10] sm:$0xff]
    %v1068 = vld [vmem:[%s1064 + $0x18] sm:$0xff]
    %v1069 = vperm.slane %v32, 6
    %v1071 = vsel %vm79, %v1063, 0
    %1073 = vmatpush.msra.mxu0 0.0
    %1074 = vmatpush.msra.mxu0 0.0
    %1075 = vmatpush.msra.mxu0 0.0
    %1076 = vmatpush.msra.mxu0 0.0
    %1077 = vmatpush.msra.mxu0 0.0
    %1078 = vmatpush.msra.mxu0 0.0
    %1079 = vmatpush.msra.mxu0 0.0
    %1080 = vmatpush.msra.mxu0 0.0
    %1081 = vmatpush.msra.mxu0 0.0
    %1082 = vmatpush.msra.mxu0 0.0
    %1083 = vmatpush.msra.mxu0 0.0
    %1084 = vmatpush.msra.mxu0 0.0
    %1085 = vmatpush.msra.mxu0 %v1068
    %1086 = vmatpush.msra.mxu0 %v1067
    %1087 = vmatpush.msra.mxu0 %v1066
    %1088 = vmatpush.msra.mxu0 %v1065
    %1089 = vmatmul.f32.gmra.mxu0 %v1071
    %v1090 = vpop.f32.mrf.mxu0
    %v1091 = vadd.f32 %v1069, %v1090
    %1092 = vdwg.mxu0
    %v1093 = vmul.f32 %v1091, %v1091
    %v1094 = vmul.f32 %v1091, %v1093
    %v1095 = vmul.f32 %v1094, 0.044715
    %v1096 = vadd.f32 %v1091, %v1095
    %v1097 = vmul.f32 %v1096, 0.7978846
    %v1098 = vtanh.pop %v1097
    %v1099 = vadd.f32 %v1098, 1.0
    %v1100 = vmul.f32 %v1099, 0.5
    %v1101 = vmul.f32 %v1091, %v1100
    %s1102 = scalar_lea.vmem %s7, 64
    %v1103 = vld [vmem:[%s1102] sm:$0xff]
    %v1104 = vld [vmem:[%s1102 + $0x8] sm:$0xff]
    %v1105 = vld [vmem:[%s1102 + $0x10] sm:$0xff]
    %v1106 = vld [vmem:[%s1102 + $0x18] sm:$0xff]
    %v1107 = vld [vmem:[%s1102 + $0x20] sm:$0xff]
    %v1108 = vld [vmem:[%s1102 + $0x28] sm:$0xff]
    %v1109 = vld [vmem:[%s1102 + $0x30] sm:$0xff]
    %v1110 = vld [vmem:[%s1102 + $0x38] sm:$0xff]
    %v1111 = vperm.slane %v32, 7
    %v1113 = vsel %vm586, %v1101, 0
    %1115 = vmatpush.msra.mxu0 0.0
    %1116 = vmatpush.msra.mxu0 0.0
    %1117 = vmatpush.msra.mxu0 0.0
    %1118 = vmatpush.msra.mxu0 0.0
    %1119 = vmatpush.msra.mxu0 0.0
    %1120 = vmatpush.msra.mxu0 0.0
    %1121 = vmatpush.msra.mxu0 0.0
    %1122 = vmatpush.msra.mxu0 0.0
    %1123 = vmatpush.msra.mxu0 %v1110
    %1124 = vmatpush.msra.mxu0 %v1109
    %1125 = vmatpush.msra.mxu0 %v1108
    %1126 = vmatpush.msra.mxu0 %v1107
    %1127 = vmatpush.msra.mxu0 %v1106
    %1128 = vmatpush.msra.mxu0 %v1105
    %1129 = vmatpush.msra.mxu0 %v1104
    %1130 = vmatpush.msra.mxu0 %v1103
    %1131 = vmatmul.f32.gmra.mxu0 %v1113
    %v1132 = vpop.f32.mrf.mxu0
    %v1133 = vadd.f32 %v1111, %v1132
    %1134 = vdwg.mxu0
    %v1135 = vadd.f32 %v1063, %v1133
    %v1136 = vsel %vm79, %v1135, 0.0
    %1137 = vadd.xlane.f32.xlu0 %v1136
    %v1138 = vpop.xlane.xlu0 %1137
    %v1139 = vmul.f32 %v1138, %v89
    %v1140 = vsub.f32 %v1135, %v1139
    %v1141 = vmul.f32 %v1140, %v1140
    %v1142 = vsel %vm79, %v1141, 0.0
    %1143 = vadd.xlane.f32.xlu0 %v1142
    %v1144 = vpop.xlane.xlu0 %1143
    %v1145 = vmul.f32 %v1144, %v89
    %v1146 = vadd.f32 %v1145, 1e-05
    %v1147 = vrsqrt.pop %v1146
    %v1148 = vmul.f32 %v1147, %v1146
    %v1149 = vmul.f32 %v1148, %v1147
    %v1150 = vmul.f32 0.5, %v1149
    %v1151 = vsub.f32 1.5, %v1150
    %v1152 = vmul.f32 %v1147, %v1151
    %vm1153 = vweird.f32 %v1146
    %vm1154 = vweird.f32 %v1147
    %vm1155 = vmor %vm1153, %vm1154
    %v1156 = vsel %vm1155, %v1147, %v1152
    %v1157 = vmul.f32 %v1140, %v1156
    %v1158 = vperm.slane %v33, 2
    %v1159 = vmul.f32 %v1157, %v1158
    %v1160 = vperm.slane %v33, 3
    %v1161 = vadd.f32 %v1159, %v1160
    %v1162 = vld [vmem:[%s3] sm:$0xff]
    %v1163 = vld [vmem:[%s3 + $0x8] sm:$0xff]
    %v1164 = vld [vmem:[%s3 + $0x10] sm:$0xff]
    %v1165 = vld [vmem:[%s3 + $0x18] sm:$0xff]
    %v1166 = vperm.slane %v31, 3
    %v1168 = vsel %vm79, %v1161, 0
    %1170 = vmatpush.msra.mxu0 0.0
    %1171 = vmatpush.msra.mxu0 0.0
    %1172 = vmatpush.msra.mxu0 0.0
    %1173 = vmatpush.msra.mxu0 0.0
    %1174 = vmatpush.msra.mxu0 0.0
    %1175 = vmatpush.msra.mxu0 0.0
    %1176 = vmatpush.msra.mxu0 0.0
    %1177 = vmatpush.msra.mxu0 0.0
    %1178 = vmatpush.msra.mxu0 0.0
    %1179 = vmatpush.msra.mxu0 0.0
    %1180 = vmatpush.msra.mxu0 0.0
    %1181 = vmatpush.msra.mxu0 0.0
    %1182 = vmatpush.msra.mxu0 %v1165
    %1183 = vmatpush.msra.mxu0 %v1164
    %1184 = vmatpush.msra.mxu0 %v1163
    %1185 = vmatpush.msra.mxu0 %v1162
    %1186 = vmatmul.f32.gmra.mxu0 %v1168
    %v1187 = vpop.f32.mrf.mxu0
    %v1188 = vadd.f32 %v1166, %v1187
    %1189 = vdwg.mxu0
    %v1190 = vxor.u32 %v1188, 2147483648
    %v1191 = vmul.f32 %v1190, 1.442695
    %v1192 = vpow.pop %v1191
    %v1193 = vadd.f32 %v1192, 1.0
    %v1194 = vrcp.pop %v1193
    %v1195 = vmul.f32 %v1193, %v1194
    %v1196 = vsub.f32 1.0, %v1195
    %v1197 = vmul.f32 %v1194, %v1196
    %v1198 = vadd.f32 %v1194, %v1197
    %vm1199 = vweird.f32 %v1193
    %vm1200 = vweird.f32 %v1194
    %vm1201 = vmor %vm1199, %vm1200
    %v1202 = vsel %vm1201, %v1194, %v1198
    %v1203 = vand.u32 2147483647, %v1193
    %vm1204 = vcmp.eq.f32.partialorder %v1203, 8.507059e+37
    %v1205 = vand.u32 %v1193, 2147483648
    %v1206 = vor.u32 1.1754944e-38, %v1205
    %v1207 = vsel %vm1204, %v1206, %v1202
    %v1208 = vmul.f32 1.0, %v1207
    %1209 = vst [vmem:[#allocation2] sm:$0xff] %v1208
    // Predicated region
    $region34: #{tpu_custom_call.1} parent=1 // pred_check
      _
    $region35: #{tpu_custom_call.1} parent=1 // pred_check_branch
      %1211 = sbr.rel (0) target = $region37
    $region36: #{tpu_custom_call.1} parent=1 // pred_region
      %1213 = vsyncadd [#allocation3], 0
      %s1215 = sshll.u32 [#allocation2], 4
      %s1216 = int_to_ptr.vmem [resolvable:$true] %s1215
      %s1217 = sshll.u32 %s8, 4
      %s1218 = int_to_ptr.hbm [resolvable:$true] %s1217
      %1220 = dma.vmem_to_hbm [thread:$0]  %s1216, 128, %s1218, [#allocation3]
    $region37: #{tpu_custom_call.1} parent=1 // pred_fallthru
      _
    // Predicated region
    $region38: #{tpu_custom_call.1} parent=1 // pred_check
      _
    $region39: #{tpu_custom_call.1} parent=1 // pred_check_branch
      %1222 = sbr.rel (0) target = $region41
    $region40: #{tpu_custom_call.1} parent=1 // pred_region
      %1224 = dma.done [#allocation3], 128
    $region41: #{tpu_custom_call.1} parent=1 // pred_fallthru
      _
    %1225 = vsyncpa [#allocation3], 1

</llo_original>
